<compile_context>
chip_gen: v7x
topology: tpu7x:2x2x1
jax: 0.10.0
libtpu: 0.0.40
codegen_flags: <defaults>
</compile_context>

<pallas_src>
import jax
import jax.numpy as jnp
from jax import lax
from jax.experimental import pallas as pl
from jax.experimental.pallas import tpu as pltpu

LANE = 128
DEFAULT_TILE = 512                              # stage-2 tm = tk tile
XWL_RESIDENT_BYTES = 4 * 1024 * 1024            # keep XW_l VMEM-resident below this
BN_EPS = 1e-5                                   # nn.BatchNorm1d default eps
NORM_EPS = 1e-12                                # F.normalize default eps
BN_SCALE = 1.0 / (1.0 + BN_EPS) ** 0.5          # eval-mode BN with init running stats


def _round_up(x, m):
    return ((x + m - 1) // m) * m


# ----------------------------- Pallas kernels -----------------------------

def xw_kernel(x_ref, wl_ref, wr_ref, xwl_ref, xwr_ref):
    """Stage 1: per row-tile, xw_l = x @ W_l_cat, xw_r = x @ W_r_cat (fused est|gnn)."""
    x = x_ref[...]
    xwl = jnp.dot(x, wl_ref[...], preferred_element_type=jnp.float32)
    xwr = jnp.dot(x, wr_ref[...], preferred_element_type=jnp.float32)
    # xw_l feeds the big N^2 aggregation -> store bf16 (halves its HBM/VMEM bytes).
    xwl_ref[...] = xwl.astype(jnp.bfloat16)
    # xw_r is the root term added once per row -> keep f32.
    xwr_ref[...] = xwr


def make_sage_kernel(tk, xwl_resident):
    """Stage 2: 0/1-adjacency aggregation (K-tiled) + fused SAGE epilogue + classifier.

    Fused hidden-dim column layout (width hcp, zero-padded):
      col 0      : estimator SAGE output (1 unit)
      cols 1..H  : GNN SAGE output (H units)
      cols H+1.. : zero padding (contributes nothing anywhere)
    Output layout (width LANE): col 0 = classifier(z) = y, col 1 = s (passthrough).
    """

    def kernel(a_ref, xwl_ref, xwr_ref, invdeg_ref, b_ref, mask_ref,
               cw_ref, cb_ref, y_ref, acc_ref):
        k = pl.program_id(1)

        @pl.when(k == 0)
        def _():
            acc_ref[...] = jnp.zeros_like(acc_ref)

        # int8 0/1 counts -> bf16 (exact); bf16 x bf16 -> f32 accumulate on the MXU.
        a = a_ref[...].astype(jnp.float32).astype(jnp.bfloat16)
        if xwl_resident:
            start = pl.multiple_of(k * tk, tk)
            xwl = xwl_ref[pl.ds(start, tk), :]
        else:
            xwl = xwl_ref[...]
        acc_ref[...] += jnp.dot(a, xwl, preferred_element_type=jnp.float32)

        @pl.when(k == pl.num_programs(1) - 1)
        def _():
            # h = (sum_j A_ij * XW_l[j]) / deg_i + XW_r[i] + b   (SAGEConv mean aggr,
            # bias lives in lin_l); 1/deg applied here in f32 for accuracy.
            h = acc_ref[...] * invdeg_ref[...] + xwr_ref[...] + b_ref[...]

            # normalize=True: row-wise L2 normalization, applied PER LAYER slice.
            sq = h * h
            s0 = sq[:, 0:1]                                   # estimator column
            tot = jnp.sum(sq, axis=-1, keepdims=True)         # est + gnn (+ zero pad)
            inv_est = lax.rsqrt(jnp.maximum(s0, NORM_EPS * NORM_EPS))
            inv_gnn = lax.rsqrt(jnp.maximum(tot - s0, NORM_EPS * NORM_EPS))

            # transition: ReLU -> BatchNorm1d(eval, init stats) -> Dropout(identity).
            # relu(h)*scale == relu(h*scale) since scale > 0; BN constant folded in.
            m = mask_ref[...]                                 # (1, hcp): col0=1 else 0
            scale = (m * inv_est + (1.0 - m) * inv_gnn) * BN_SCALE
            h = jnp.maximum(h, 0.0) * scale

            # Folded classifier: col 0 <- cls_w . z + cls_b, col 1 <- s passthrough.
            y_ref[...] = jnp.dot(h, cw_ref[...],
                                 preferred_element_type=jnp.float32) + cb_ref[...]

    return kernel


# ----------------------------- wrappers -----------------------------

def fused_sage_forward(a_i8, inv_deg, x_pad, params, *, tile):
    npad, f = x_pad.shape
    wl, wr, b = params["wl"], params["wr"], params["b"]
    mask, cw, cb = params["est_mask"], params["cls_w"], params["cls_b"]
    hcp = wl.shape[1]
    tm = tk = tile

    # Stage 1: XW precompute, tiled over rows.
    xwl, xwr = pl.pallas_call(
        xw_kernel,
        out_shape=(jax.ShapeDtypeStruct((npad, hcp), jnp.bfloat16),
                   jax.ShapeDtypeStruct((npad, hcp), jnp.float32)),
        grid_spec=pltpu.PrefetchScalarGridSpec(
            num_scalar_prefetch=0,
            grid=(npad // tm,),
            in_specs=[pl.BlockSpec((tm, f), lambda i: (i, 0)),
                      pl.BlockSpec((f, hcp), lambda i: (0, 0)),
                      pl.BlockSpec((f, hcp), lambda i: (0, 0))],
            out_specs=[pl.BlockSpec((tm, hcp), lambda i: (i, 0)),
                       pl.BlockSpec((tm, hcp), lambda i: (i, 0))]),
        compiler_params=pltpu.CompilerParams(dimension_semantics=("parallel",)),
    )(x_pad, wl, wr)

    # XW_l fully VMEM-resident (DMA'd once) when small; k-blocked otherwise.
    xwl_resident = (npad * hcp * 2) <= XWL_RESIDENT_BYTES
    if xwl_resident:
        xwl_spec = pl.BlockSpec((npad, hcp), lambda i, k: (0, 0))
    else:
        xwl_spec = pl.BlockSpec((tk, hcp), lambda i, k: (k, 0))

    # Stage 2: K-tiled aggregation + fused epilogue (1/deg, norm, ReLU, BN, classifier).
    y_pad = pl.pallas_call(
        make_sage_kernel(tk, xwl_resident),
        out_shape=jax.ShapeDtypeStruct((npad, LANE), jnp.float32),
        grid_spec=pltpu.PrefetchScalarGridSpec(
            num_scalar_prefetch=0,
            grid=(npad // tm, npad // tk),
            in_specs=[pl.BlockSpec((tm, tk), lambda i, k: (i, k)),     # A (int8 0/1 counts)
                      xwl_spec,                                        # XW_l (sources)
                      pl.BlockSpec((tm, hcp), lambda i, k: (i, 0)),    # XW_r (roots)
                      pl.BlockSpec((tm, 1), lambda i, k: (i, 0)),      # 1/deg (f32)
                      pl.BlockSpec((1, hcp), lambda i, k: (0, 0)),     # fused bias
                      pl.BlockSpec((1, hcp), lambda i, k: (0, 0)),     # estimator-col mask
                      pl.BlockSpec((hcp, LANE), lambda i, k: (0, 0)),  # folded classifier W
                      pl.BlockSpec((1, LANE), lambda i, k: (0, 0))],   # folded classifier b
            out_specs=pl.BlockSpec((tm, LANE), lambda i, k: (i, 0)),   # y|s
            scratch_shapes=[pltpu.VMEM((tm, hcp), jnp.float32)]),
        compiler_params=pltpu.CompilerParams(
            dimension_semantics=("parallel", "arbitrary")),
    )(a_i8, xwl, xwr, inv_deg, b, mask, cw, cb)
    return y_pad


def prepare_graph(edge_index, num_nodes, *, tile=DEFAULT_TILE):
    """One-time graph preprocessing (hoisted out of the per-forward path).

    Dense adjacency implementing PyG mean aggregation for SAGEConv
    (edge_index[0]=source, edge_index[1]=target; flow source->target):
    row = destination, col = source.  Stored as unnormalized edge counts in
    int8 (exact); the per-row 1/deg is kept separately in f32 and applied in
    the kernel epilogue."""
    tile_eff = min(tile, _round_up(num_nodes, LANE))
    npad = _round_up(num_nodes, tile_eff)
    src = jnp.asarray(edge_index[0], jnp.int32)
    dst = jnp.asarray(edge_index[1], jnp.int32)
    counts = jnp.zeros((npad, npad), jnp.float32).at[dst, src].add(1.0)
    deg = jnp.sum(counts, axis=1, keepdims=True)
    inv_deg = 1.0 / jnp.maximum(deg, 1.0)
    adj = jnp.clip(counts, 0.0, 127.0).astype(jnp.int8)
    return adj, inv_deg


def fairgnn_forward(params, adj, inv_deg, x):
    npad = adj.shape[0]
    tile = min(DEFAULT_TILE, npad)        # matches prepare_graph's padding rule
    n = x.shape[0]
    x_pad = jnp.pad(x, ((0, npad - n), (0, 0)))
    y_pad = fused_sage_forward(adj, inv_deg, x_pad, params, tile=tile)
    # col 0 = classifier(GNN(g, x)) = y ;  col 1 = estimator(g, x) = s.
    return y_pad[:n, 0:1], y_pad[:n, 1:2]


# ----------------------------- deterministic params -----------------------------

def xavier_uniform(key, fan_in, fan_out):
    bound = (6.0 / (fan_in + fan_out)) ** 0.5
    return jax.random.uniform(key, (fan_in, fan_out), jnp.float32, -bound, bound)


def init_raw_params(key, nfeat, num_hidden):
    ks = jax.random.split(key, 5)
    return {
        # estimator SAGEConv(nfeat, 1)
        "est_wl": xavier_uniform(ks[0], nfeat, 1),
        "est_wr": xavier_uniform(ks[1], nfeat, 1),
        "est_b": jnp.zeros((1,), jnp.float32),
        # GNN SAGEConv(nfeat, num_hidden)
        "gnn_wl": xavier_uniform(ks[2], nfeat, num_hidden),
        "gnn_wr": xavier_uniform(ks[3], nfeat, num_hidden),
        "gnn_b": jnp.zeros((num_hidden,), jnp.float32),
        # classifier Linear(num_hidden, 1)
        "cls_w": xavier_uniform(ks[4], num_hidden, 1),
        "cls_b": jnp.zeros((1,), jnp.float32),
    }


def prepare_params(raw, nfeat, num_hidden):
    """Concatenate estimator|GNN weights along the output dim (col 0 = estimator,
    cols 1..H = GNN), fold the classifier + estimator passthrough into one
    (hcp, LANE) matrix, and lane-pad ONCE at init (outside the jitted forward)."""
    hc = 1 + num_hidden
    hcp = _round_up(hc, LANE)

    wl = jnp.zeros((nfeat, hcp), jnp.float32)
    wl = wl.at[:, 0:1].set(raw["est_wl"]).at[:, 1:hc].set(raw["gnn_wl"])
    wr = jnp.zeros((nfeat, hcp), jnp.float32)
    wr = wr.at[:, 0:1].set(raw["est_wr"]).at[:, 1:hc].set(raw["gnn_wr"])
    b = jnp.zeros((1, hcp), jnp.float32)
    b = b.at[:, 0:1].set(raw["est_b"].reshape(1, 1))
    b = b.at[:, 1:hc].set(raw["gnn_b"].reshape(1, -1))

    # Folded classifier: output col 0 = cls_w . z + cls_b (GNN rows only),
    # output col 1 = estimator passthrough (s).  Padding rows stay zero.
    cw = jnp.zeros((hcp, LANE), jnp.float32)
    cw = cw.at[1:hc, 0:1].set(raw["cls_w"]).at[0, 1].set(1.0)
    cb = jnp.zeros((1, LANE), jnp.float32).at[:, 0:1].set(raw["cls_b"].reshape(1, 1))

    est_mask = jnp.zeros((1, hcp), jnp.float32).at[:, 0].set(1.0)

    return {"wl": wl, "wr": wr, "b": b, "cls_w": cw, "cls_b": cb,
            "est_mask": est_mask}


if __name__ == "__main__":
    N, NFEAT, NUM_HIDDEN = 64, 32, 32

    key = jax.random.PRNGKey(0)
    k_x, k_p = jax.random.split(key)

    x = jax.random.normal(k_x, (N, NFEAT), jnp.float32)

    # deterministic directed edge set: each node receives edges from i+1, i+3, i+7 (mod N)
    idx = jnp.arange(N)
    src = jnp.concatenate([(idx + 1) % N, (idx + 3) % N, (idx + 7) % N])
    dst = jnp.concatenate([idx, idx, idx])
    edge_index = jnp.stack([src, dst]).astype(jnp.int32)   # [2, E]

    raw = init_raw_params(k_p, NFEAT, NUM_HIDDEN)
    params = prepare_params(raw, NFEAT, NUM_HIDDEN)         # pad/fuse once at init
    adj, inv_deg = prepare_graph(edge_index, N)             # one-time graph prep (hoisted)

    y, s = jax.jit(fairgnn_forward)(params, adj, inv_deg, x)
    jax.block_until_ready((y, s))

    assert y.shape == (N, 1) and s.shape == (N, 1)
    assert bool(jnp.all(jnp.isfinite(y))) and bool(jnp.all(jnp.isfinite(s)))
    print("KERNEL_OK")
</pallas_src>

<mosaic_0001>
module attributes {stable_mosaic.version = 11 : i64} {
  func.func @xw_kernel(%arg0: i32, %arg1: memref<128x32xf32, #tpu.memory_space<vmem>>, %arg2: memref<32x128xf32, #tpu.memory_space<vmem>>, %arg3: memref<32x128xf32, #tpu.memory_space<vmem>>, %arg4: memref<128x128xbf16, #tpu.memory_space<vmem>>, %arg5: memref<128x128xf32, #tpu.memory_space<vmem>>) attributes {dimension_semantics = [#tpu.dimension_semantics<parallel>], iteration_bounds = array<i64: 1>, scalar_prefetch = 0 : i64, scratch_operands = 0 : i64, tpu.core_type = #tpu.core_type<tc>, window_params = [{transform_indices = @transform_0, window_bounds = array<i64: 128, 32>}, {pipeline_mode = #tpu.pipeline_mode<synchronous>, transform_indices = @transform_1, window_bounds = array<i64: 32, 128>}, {pipeline_mode = #tpu.pipeline_mode<synchronous>, transform_indices = @transform_2, window_bounds = array<i64: 32, 128>}, {transform_indices = @transform_3, window_bounds = array<i64: 128, 128>}, {transform_indices = @transform_4, window_bounds = array<i64: 128, 128>}]} {
    %c0 = arith.constant 0 : index
    %c0_0 = arith.constant 0 : index
    %0 = vector.load %arg1[%c0, %c0_0] : memref<128x32xf32, #tpu.memory_space<vmem>>, vector<128x32xf32>
    %c0_1 = arith.constant 0 : index
    %c0_2 = arith.constant 0 : index
    %1 = vector.load %arg2[%c0_1, %c0_2] : memref<32x128xf32, #tpu.memory_space<vmem>>, vector<32x128xf32>
    %cst = arith.constant dense<0.000000e+00> : vector<128x128xf32>
    %2 = tpu.matmul %0, %1, %cst {dimension_numbers = #tpu.dot_dimension_numbers<[1], [0], [0], [1], [0, 0, 1, 1], [], []>} : vector<128x32xf32>, vector<32x128xf32>, vector<128x128xf32> -> vector<128x128xf32>
    %c0_3 = arith.constant 0 : index
    %c0_4 = arith.constant 0 : index
    %3 = vector.load %arg3[%c0_3, %c0_4] : memref<32x128xf32, #tpu.memory_space<vmem>>, vector<32x128xf32>
    %cst_5 = arith.constant dense<0.000000e+00> : vector<128x128xf32>
    %4 = tpu.matmul %0, %3, %cst_5 {dimension_numbers = #tpu.dot_dimension_numbers<[1], [0], [0], [1], [0, 0, 1, 1], [], []>} : vector<128x32xf32>, vector<32x128xf32>, vector<128x128xf32> -> vector<128x128xf32>
    %5 = arith.truncf %2 : vector<128x128xf32> to vector<128x128xbf16>
    %c0_6 = arith.constant 0 : index
    %c0_7 = arith.constant 0 : index
    %6 = vector.load %arg4[%c0_6, %c0_7] : memref<128x128xbf16, #tpu.memory_space<vmem>>, vector<128x128xbf16>
    tpu.vector_store %arg4[%c0_6, %c0_7], %5 {strides = array<i32>} : memref<128x128xbf16, #tpu.memory_space<vmem>>, vector<128x128xbf16>,
    %c0_8 = arith.constant 0 : index
    %c0_9 = arith.constant 0 : index
    %7 = vector.load %arg5[%c0_8, %c0_9] : memref<128x128xf32, #tpu.memory_space<vmem>>, vector<128x128xf32>
    tpu.vector_store %arg5[%c0_8, %c0_9], %4 {strides = array<i32>} : memref<128x128xf32, #tpu.memory_space<vmem>>, vector<128x128xf32>,
    return
  }
  func.func @transform_0(%arg0: i32) -> (i32, i32) {
    %c0_i32 = arith.constant 0 : i32
    %c0_i32_0 = arith.constant 0 : i32
    return %arg0, %c0_i32 : i32, i32
  }
  func.func @transform_1(%arg0: i32) -> (i32, i32) {
    %c0_i32 = arith.constant 0 : i32
    %c0_i32_0 = arith.constant 0 : i32
    %c0_i32_1 = arith.constant 0 : i32
    return %c0_i32, %c0_i32_0 : i32, i32
  }
  func.func @transform_2(%arg0: i32) -> (i32, i32) {
    %c0_i32 = arith.constant 0 : i32
    %c0_i32_0 = arith.constant 0 : i32
    %c0_i32_1 = arith.constant 0 : i32
    return %c0_i32, %c0_i32_0 : i32, i32
  }
  func.func @transform_3(%arg0: i32) -> (i32, i32) {
    %c0_i32 = arith.constant 0 : i32
    %c0_i32_0 = arith.constant 0 : i32
    return %arg0, %c0_i32 : i32, i32
  }
  func.func @transform_4(%arg0: i32) -> (i32, i32) {
    %c0_i32 = arith.constant 0 : i32
    %c0_i32_0 = arith.constant 0 : i32
    return %arg0, %c0_i32 : i32, i32
  }
}

module attributes {stable_mosaic.version = 11 : i64} {
  func.func @kernel(%arg0: i32, %arg1: i32, %arg2: memref<128x128xi8, #tpu.memory_space<vmem>>, %arg3: memref<128x128xbf16, #tpu.memory_space<vmem>>, %arg4: memref<128x128xf32, #tpu.memory_space<vmem>>, %arg5: memref<128x1xf32, #tpu.memory_space<vmem>>, %arg6: memref<1x128xf32, #tpu.memory_space<vmem>>, %arg7: memref<1x128xf32, #tpu.memory_space<vmem>>, %arg8: memref<128x128xf32, #tpu.memory_space<vmem>>, %arg9: memref<1x128xf32, #tpu.memory_space<vmem>>, %arg10: memref<128x128xf32, #tpu.memory_space<vmem>>, %arg11: memref<128x128xf32, #tpu.memory_space<vmem>>) attributes {dimension_semantics = [#tpu.dimension_semantics<parallel>, #tpu.dimension_semantics<arbitrary>], iteration_bounds = array<i64: 1, 1>, scalar_prefetch = 0 : i64, scratch_operands = 1 : i64, tpu.core_type = #tpu.core_type<tc>, window_params = [{transform_indices = @transform_0, window_bounds = array<i64: 128, 128>}, {pipeline_mode = #tpu.pipeline_mode<synchronous>, transform_indices = @transform_1, window_bounds = array<i64: 128, 128>}, {transform_indices = @transform_2, window_bounds = array<i64: 128, 128>}, {transform_indices = @transform_3, window_bounds = array<i64: 128, 1>}, {pipeline_mode = #tpu.pipeline_mode<synchronous>, transform_indices = @transform_4, window_bounds = array<i64: 1, 128>}, {pipeline_mode = #tpu.pipeline_mode<synchronous>, transform_indices = @transform_5, window_bounds = array<i64: 1, 128>}, {pipeline_mode = #tpu.pipeline_mode<synchronous>, transform_indices = @transform_6, window_bounds = array<i64: 128, 128>}, {pipeline_mode = #tpu.pipeline_mode<synchronous>, transform_indices = @transform_7, window_bounds = array<i64: 1, 128>}, {transform_indices = @transform_8, window_bounds = array<i64: 128, 128>}]} {
    %c0_i32 = arith.constant 0 : i32
    %0 = arith.cmpi eq, %arg1, %c0_i32 : i32
    %1 = arith.extui %0 : i1 to i32
    %c0_i32_0 = arith.constant 0 : i32
    %2 = arith.cmpi ne, %1, %c0_i32_0 : i32
    scf.if %2 {
      %cst_9 = arith.constant 0.000000e+00 : f32
      %17 = vector.broadcast %cst_9 : f32 to vector<128x128xf32>
      %c0_10 = arith.constant 0 : index
      %c0_11 = arith.constant 0 : index
      %18 = vector.load %arg11[%c0_10, %c0_11] : memref<128x128xf32, #tpu.memory_space<vmem>>, vector<128x128xf32>
      tpu.vector_store %arg11[%c0_10, %c0_11], %17 {strides = array<i32>} : memref<128x128xf32, #tpu.memory_space<vmem>>, vector<128x128xf32>,
    } else {
    }
    %c0 = arith.constant 0 : index
    %c0_1 = arith.constant 0 : index
    %3 = vector.load %arg2[%c0, %c0_1] : memref<128x128xi8, #tpu.memory_space<vmem>>, vector<128x128xi8>
    %4 = arith.sitofp %3 : vector<128x128xi8> to vector<128x128xf32>
    %5 = arith.truncf %4 : vector<128x128xf32> to vector<128x128xbf16>
    %c128_i32 = arith.constant 128 : i32
    %6 = arith.muli %arg1, %c128_i32 : i32
    %7 = tpu.assume_multiple %6, 128 : i32
    %8 = arith.index_cast %7 : i32 to index
    %c0_2 = arith.constant 0 : index
    %9 = vector.load %arg3[%8, %c0_2] : memref<128x128xbf16, #tpu.memory_space<vmem>>, vector<128x128xbf16>
    %c0_3 = arith.constant 0 : index
    %c0_4 = arith.constant 0 : index
    %10 = vector.load %arg11[%c0_3, %c0_4] : memref<128x128xf32, #tpu.memory_space<vmem>>, vector<128x128xf32>
    %cst = arith.constant dense<0.000000e+00> : vector<128x128xf32>
    %11 = tpu.matmul %5, %9, %cst {dimension_numbers = #tpu.dot_dimension_numbers<[1], [0], [0], [1], [0, 0, 1, 1], [], []>} : vector<128x128xbf16>, vector<128x128xbf16>, vector<128x128xf32> -> vector<128x128xf32>
    %12 = arith.addf %10, %11 : vector<128x128xf32>
    %c0_5 = arith.constant 0 : index
    %c0_6 = arith.constant 0 : index
    %13 = vector.load %arg11[%c0_5, %c0_6] : memref<128x128xf32, #tpu.memory_space<vmem>>, vector<128x128xf32>
    tpu.vector_store %arg11[%c0_5, %c0_6], %12 {strides = array<i32>} : memref<128x128xf32, #tpu.memory_space<vmem>>, vector<128x128xf32>,
    %c0_i32_7 = arith.constant 0 : i32
    %14 = arith.cmpi eq, %arg1, %c0_i32_7 : i32
    %15 = arith.extui %14 : i1 to i32
    %c0_i32_8 = arith.constant 0 : i32
    %16 = arith.cmpi ne, %15, %c0_i32_8 : i32
    scf.if %16 {
      %c0_9 = arith.constant 0 : index
      %c0_10 = arith.constant 0 : index
      %17 = vector.load %arg11[%c0_9, %c0_10] : memref<128x128xf32, #tpu.memory_space<vmem>>, vector<128x128xf32>
      %c0_11 = arith.constant 0 : index
      %c0_12 = arith.constant 0 : index
      %18 = vector.load %arg5[%c0_11, %c0_12] : memref<128x1xf32, #tpu.memory_space<vmem>>, vector<128x1xf32>
      %19 = vector.broadcast %18 : vector<128x1xf32> to vector<128x128xf32>
      %20 = arith.mulf %17, %19 : vector<128x128xf32>
      %c0_13 = arith.constant 0 : index
      %c0_14 = arith.constant 0 : index
      %21 = vector.load %arg4[%c0_13, %c0_14] : memref<128x128xf32, #tpu.memory_space<vmem>>, vector<128x128xf32>
      %22 = arith.addf %20, %21 : vector<128x128xf32>
      %c0_15 = arith.constant 0 : index
      %c0_16 = arith.constant 0 : index
      %23 = vector.load %arg6[%c0_15, %c0_16] : memref<1x128xf32, #tpu.memory_space<vmem>>, vector<1x128xf32>
      %24 = vector.broadcast %23 : vector<1x128xf32> to vector<128x128xf32>
      %25 = arith.addf %22, %24 : vector<128x128xf32>
      %26 = arith.mulf %25, %25 : vector<128x128xf32>
      %27 = vector.extract_strided_slice %26 {offsets = [0, 0], sizes = [128, 1], strides = [1, 1]} : vector<128x128xf32> to vector<128x1xf32>
      %cst_17 = arith.constant dense<0.000000e+00> : vector<128xf32>
      %28 = vector.multi_reduction <add>, %26, %cst_17 [1] : vector<128x128xf32> to vector<128xf32>
      %29 = vector.shape_cast %28 : vector<128xf32> to vector<128x1xf32>
      %cst_18 = arith.constant 1.000000e-24 : f32
      %30 = vector.broadcast %cst_18 : f32 to vector<128x1xf32>
      %31 = arith.maximumf %27, %30 : vector<128x1xf32>
      %32 = math.rsqrt %31 : vector<128x1xf32>
      %33 = arith.subf %29, %27 : vector<128x1xf32>
      %cst_19 = arith.constant 1.000000e-24 : f32
      %34 = vector.broadcast %cst_19 : f32 to vector<128x1xf32>
      %35 = arith.maximumf %33, %34 : vector<128x1xf32>
      %36 = math.rsqrt %35 : vector<128x1xf32>
      %c0_20 = arith.constant 0 : index
      %c0_21 = arith.constant 0 : index
      %37 = vector.load %arg7[%c0_20, %c0_21] : memref<1x128xf32, #tpu.memory_space<vmem>>, vector<1x128xf32>
      %38 = vector.broadcast %37 : vector<1x128xf32> to vector<128x128xf32>
      %39 = vector.broadcast %32 : vector<128x1xf32> to vector<128x128xf32>
      %40 = arith.mulf %38, %39 : vector<128x128xf32>
      %cst_22 = arith.constant 1.000000e+00 : f32
      %41 = vector.broadcast %cst_22 : f32 to vector<1x128xf32>
      %42 = arith.subf %41, %37 : vector<1x128xf32>
      %43 = vector.broadcast %42 : vector<1x128xf32> to vector<128x128xf32>
      %44 = vector.broadcast %36 : vector<128x1xf32> to vector<128x128xf32>
      %45 = arith.mulf %43, %44 : vector<128x128xf32>
      %46 = arith.addf %40, %45 : vector<128x128xf32>
      %cst_23 = arith.constant 0.999994993 : f32
      %47 = vector.broadcast %cst_23 : f32 to vector<128x128xf32>
      %48 = arith.mulf %46, %47 : vector<128x128xf32>
      %cst_24 = arith.constant 0.000000e+00 : f32
      %49 = vector.broadcast %cst_24 : f32 to vector<128x128xf32>
      %50 = arith.maximumf %25, %49 : vector<128x128xf32>
      %51 = arith.mulf %50, %48 : vector<128x128xf32>
      %c0_25 = arith.constant 0 : index
      %c0_26 = arith.constant 0 : index
      %52 = vector.load %arg8[%c0_25, %c0_26] : memref<128x128xf32, #tpu.memory_space<vmem>>, vector<128x128xf32>
      %cst_27 = arith.constant dense<0.000000e+00> : vector<128x128xf32>
      %53 = tpu.matmul %51, %52, %cst_27 {dimension_numbers = #tpu.dot_dimension_numbers<[1], [0], [0], [1], [0, 0, 1, 1], [], []>} : vector<128x128xf32>, vector<128x128xf32>, vector<128x128xf32> -> vector<128x128xf32>
      %c0_28 = arith.constant 0 : index
      %c0_29 = arith.constant 0 : index
      %54 = vector.load %arg9[%c0_28, %c0_29] : memref<1x128xf32, #tpu.memory_space<vmem>>, vector<1x128xf32>
      %55 = vector.broadcast %54 : vector<1x128xf32> to vector<128x128xf32>
      %56 = arith.addf %53, %55 : vector<128x128xf32>
      %c0_30 = arith.constant 0 : index
      %c0_31 = arith.constant 0 : index
      %57 = vector.load %arg10[%c0_30, %c0_31] : memref<128x128xf32, #tpu.memory_space<vmem>>, vector<128x128xf32>
      tpu.vector_store %arg10[%c0_30, %c0_31], %56 {strides = array<i32>} : memref<128x128xf32, #tpu.memory_space<vmem>>, vector<128x128xf32>,
    } else {
    }
    return
  }
  func.func @transform_0(%arg0: i32, %arg1: i32) -> (i32, i32) {
    %c0_i32 = arith.constant 0 : i32
    return %arg0, %arg1 : i32, i32
  }
  func.func @transform_1(%arg0: i32, %arg1: i32) -> (i32, i32) {
    %c0_i32 = arith.constant 0 : i32
    %c0_i32_0 = arith.constant 0 : i32
    %c0_i32_1 = arith.constant 0 : i32
    return %c0_i32, %c0_i32_0 : i32, i32
  }
  func.func @transform_2(%arg0: i32, %arg1: i32) -> (i32, i32) {
    %c0_i32 = arith.constant 0 : i32
    %c0_i32_0 = arith.constant 0 : i32
    return %arg0, %c0_i32 : i32, i32
  }
  func.func @transform_3(%arg0: i32, %arg1: i32) -> (i32, i32) {
    %c0_i32 = arith.constant 0 : i32
    %c0_i32_0 = arith.constant 0 : i32
    return %arg0, %c0_i32 : i32, i32
  }
  func.func @transform_4(%arg0: i32, %arg1: i32) -> (i32, i32) {
    %c0_i32 = arith.constant 0 : i32
    %c0_i32_0 = arith.constant 0 : i32
    %c0_i32_1 = arith.constant 0 : i32
    return %c0_i32, %c0_i32_0 : i32, i32
  }
  func.func @transform_5(%arg0: i32, %arg1: i32) -> (i32, i32) {
    %c0_i32 = arith.constant 0 : i32
    %c0_i32_0 = arith.constant 0 : i32
    %c0_i32_1 = arith.constant 0 : i32
    return %c0_i32, %c0_i32_0 : i32, i32
  }
  func.func @transform_6(%arg0: i32, %arg1: i32) -> (i32, i32) {
    %c0_i32 = arith.constant 0 : i32
    %c0_i32_0 = arith.constant 0 : i32
    %c0_i32_1 = arith.constant 0 : i32
    return %c0_i32, %c0_i32_0 : i32, i32
  }
  func.func @transform_7(%arg0: i32, %arg1: i32) -> (i32, i32) {
    %c0_i32 = arith.constant 0 : i32
    %c0_i32_0 = arith.constant 0 : i32
    %c0_i32_1 = arith.constant 0 : i32
    return %c0_i32, %c0_i32_0 : i32, i32
  }
  func.func @transform_8(%arg0: i32, %arg1: i32) -> (i32, i32) {
    %c0_i32 = arith.constant 0 : i32
    %c0_i32_0 = arith.constant 0 : i32
    return %arg0, %c0_i32 : i32, i32
  }
}

</mosaic_0001>

<llo_original>
// kernel: fairgnn_forward.2
$region0: #{fairgnn_forward.2}
  #allocation0 [shape = 'u32[]', space=smem, size = 0x4, offset = 0x4, fixed_abs, tag = 'smem constant byte address 0x4 - core index']
  #allocation1 [shape = 'u32[144,128]{1,0:T(1,128)}', space=vmem, size = 0x12000, scoped, tag = 'internal scratch']
  %s0 = inlined_call_operand.vmem [shape: f32[128,32], index: 0, kind: input, shape index: {}]
  %s1 = inlined_call_operand.vmem [shape: f32[32,128], index: 1, kind: input, shape index: {}]
  %s2 = inlined_call_operand.vmem [shape: f32[32,128], index: 2, kind: input, shape index: {}]
  %s3 = inlined_call_operand.vmem [shape: bf16[128,128], index: 3, kind: output, shape index: {0}]
  %s4 = inlined_call_operand.vmem [shape: f32[128,128], index: 4, kind: output, shape index: {1}]
  %5 = xla_tuple %s3, %s4
  %s6 = sld [smem:[#allocation0]]
  $region30: #{fairgnn_forward.2} parent=0
    _
  %s8 = ssub.s32 1, %s6
  %s9 = scalar_select 0, %s8, %s6
  // Predicated region
  $region2: #{fairgnn_forward.2} parent=0 // pred_check
    _
  $region3: #{fairgnn_forward.2} parent=0 // pred_check_branch
    %11 = sbr.rel (0) target = $region5
  $region4: #{fairgnn_forward.2} parent=0 // pred_region
    _
  $region5: #{fairgnn_forward.2} parent=0 // pred_fallthru
    _
  // Predicated region
  $region6: #{fairgnn_forward.2} parent=0 // pred_check
    _
  $region7: #{fairgnn_forward.2} parent=0 // pred_check_branch
    %13 = sbr.rel (0) target = $region9
  $region8: #{fairgnn_forward.2} parent=0 // pred_region
    _
  $region9: #{fairgnn_forward.2} parent=0 // pred_fallthru
    _
  // Predicated region
  $region10: #{fairgnn_forward.2} parent=0 // pred_check
    _
  $region11: #{fairgnn_forward.2} parent=0 // pred_check_branch
    %15 = sbr.rel (0) target = $region13
  $region12: #{fairgnn_forward.2} parent=0 // pred_region
    _
  $region13: #{fairgnn_forward.2} parent=0 // pred_fallthru
    _
  %v16 = vld [vmem:[%s0] sm:$0xff]
  %v17 = vld [vmem:[%s0 + $0x8] sm:$0xff]
  %v18 = vld [vmem:[%s0 + $0x10] sm:$0xff]
  %v19 = vld [vmem:[%s0 + $0x18] sm:$0xff]
  %v20 = vld [vmem:[%s0 + $0x20] sm:$0xff]
  %v21 = vld [vmem:[%s0 + $0x28] sm:$0xff]
  %v22 = vld [vmem:[%s0 + $0x30] sm:$0xff]
  %v23 = vld [vmem:[%s0 + $0x38] sm:$0xff]
  %v24 = vld [vmem:[%s0 + $0x40] sm:$0xff]
  %v25 = vld [vmem:[%s0 + $0x48] sm:$0xff]
  %v26 = vld [vmem:[%s0 + $0x50] sm:$0xff]
  %v27 = vld [vmem:[%s0 + $0x58] sm:$0xff]
  %v28 = vld [vmem:[%s0 + $0x60] sm:$0xff]
  %v29 = vld [vmem:[%s0 + $0x68] sm:$0xff]
  %v30 = vld [vmem:[%s0 + $0x70] sm:$0xff]
  %v31 = vld [vmem:[%s0 + $0x78] sm:$0xff]
  %v32 = vld [vmem:[%s1] sm:$0xff]
  %v33 = vld [vmem:[%s1 + $0x8] sm:$0xff]
  %v34 = vld [vmem:[%s1 + $0x10] sm:$0xff]
  %v35 = vld [vmem:[%s1 + $0x18] sm:$0xff]
  %vm36 = vcmask 261120
  %v38 = vsel %vm36, %v16, 0
  %v41 = vsel %vm36, %v17, 0
  %v44 = vsel %vm36, %v18, 0
  %v47 = vsel %vm36, %v19, 0
  %v50 = vsel %vm36, %v20, 0
  %v53 = vsel %vm36, %v21, 0
  %v56 = vsel %vm36, %v22, 0
  %v59 = vsel %vm36, %v23, 0
  %v62 = vsel %vm36, %v24, 0
  %v65 = vsel %vm36, %v25, 0
  %v68 = vsel %vm36, %v26, 0
  %v71 = vsel %vm36, %v27, 0
  %v74 = vsel %vm36, %v28, 0
  %v77 = vsel %vm36, %v29, 0
  %v80 = vsel %vm36, %v30, 0
  %v83 = vsel %vm36, %v31, 0
  %85 = vmatprep.subr.mxu0 0.0
  %86 = vmatpush1.msra.mxu0 %v32
  %87 = vmatprep.subr.mxu0 0.0
  %88 = vmatpush1.msra.mxu0 %v33
  %89 = vmatprep.subr.mxu0 0.0
  %90 = vmatpush1.msra.mxu0 %v34
  %91 = vmatprep.subr.mxu0 0.0
  %92 = vmatpush1.msra.mxu0 %v35
  %93 = vmatprep.subr.mxu0 0.0
  %94 = vmatpush1.msra.mxu0 0.0
  %95 = vmatprep.subr.mxu0 0.0
  %96 = vmatpush1.msra.mxu0 0.0
  %97 = vmatprep.subr.mxu0 0.0
  %98 = vmatpush1.msra.mxu0 0.0
  %99 = vmatprep.subr.mxu0 0.0
  %100 = vmatpush1.msra.mxu0 0.0
  %101 = vmatprep.subr.mxu0 0.0
  %102 = vmatpush1.msra.mxu0 0.0
  %103 = vmatprep.subr.mxu0 0.0
  %104 = vmatpush1.msra.mxu0 0.0
  %105 = vmatprep.subr.mxu0 0.0
  %106 = vmatpush1.msra.mxu0 0.0
  %107 = vmatprep.subr.mxu0 0.0
  %108 = vmatpush1.msra.mxu0 0.0
  %109 = vmatprep.subr.mxu0 0.0
  %110 = vmatpush1.msra.mxu0 0.0
  %111 = vmatprep.subr.mxu0 0.0
  %112 = vmatpush1.msra.mxu0 0.0
  %113 = vmatprep.subr.mxu0 0.0
  %114 = vmatpush1.msra.mxu0 0.0
  %115 = vmatprep.subr.mxu0 0.0
  %116 = vmatpush1.msra.mxu0 0.0
  %117 = vmatprep.subr.mxu0 0.0
  %118 = vmatpush1.msra.mxu0 0.0
  %119 = vmatprep.subr.mxu0 0.0
  %120 = vmatpush1.msra.mxu0 0.0
  %121 = vmatprep.subr.mxu0 0.0
  %122 = vmatpush1.msra.mxu0 0.0
  %123 = vmatprep.subr.mxu0 0.0
  %124 = vmatpush1.msra.mxu0 0.0
  %125 = vmatprep.subr.mxu0 0.0
  %126 = vmatpush1.msra.mxu0 0.0
  %127 = vmatprep.subr.mxu0 0.0
  %128 = vmatpush1.msra.mxu0 0.0
  %129 = vmatprep.subr.mxu0 0.0
  %130 = vmatpush1.msra.mxu0 0.0
  %131 = vmatprep.subr.mxu0 0.0
  %132 = vmatpush1.msra.mxu0 0.0
  %133 = vmatprep.subr.mxu0 0.0
  %134 = vmatpush1.msra.mxu0 0.0
  %135 = vmatprep.subr.mxu0 0.0
  %136 = vmatpush1.msra.mxu0 0.0
  %137 = vmatprep.subr.mxu0 0.0
  %138 = vmatpush1.msra.mxu0 0.0
  %139 = vmatprep.subr.mxu0 0.0
  %140 = vmatpush1.msra.mxu0 0.0
  %141 = vmatprep.subr.mxu0 0.0
  %142 = vmatpush1.msra.mxu0 0.0
  %143 = vmatprep.subr.mxu0 0.0
  %144 = vmatpush1.msra.mxu0 0.0
  %145 = vmatprep.subr.mxu0 0.0
  %146 = vmatpush1.msra.mxu0 0.0
  %147 = vmatprep.subr.mxu0 0.0
  %148 = vmatpush1.msra.mxu0 0.0
  %149 = vmatprep.mubr.f32.mxu0 0.0
  %150 = vmatmul.mubr.f32.gmra.mrb[0].mxu0 %v38
  %v151 = vpop.f32.mrb[0].mxu0
  %v152 = vadd.f32 0.0, %v151
  %v153 = vpop.f32.mrb[0].mxu0
  %154 = vmatprep.mubr.f32.mxu0 0.0
  %155 = vmatmul.mubr.f32.gmra.mrb[0].mxu0 %v41
  %v156 = vpop.f32.mrb[0].mxu0
  %v157 = vadd.f32 0.0, %v156
  %v158 = vpop.f32.mrb[0].mxu0
  %159 = vmatprep.mubr.f32.mxu0 0.0
  %160 = vmatmul.mubr.f32.gmra.mrb[0].mxu0 %v44
  %v161 = vpop.f32.mrb[0].mxu0
  %v162 = vadd.f32 0.0, %v161
  %v163 = vpop.f32.mrb[0].mxu0
  %164 = vmatprep.mubr.f32.mxu0 0.0
  %165 = vmatmul.mubr.f32.gmra.mrb[0].mxu0 %v47
  %v166 = vpop.f32.mrb[0].mxu0
  %v167 = vadd.f32 0.0, %v166
  %v168 = vpop.f32.mrb[0].mxu0
  %169 = vmatprep.mubr.f32.mxu0 0.0
  %170 = vmatmul.mubr.f32.gmra.mrb[0].mxu0 %v50
  %v171 = vpop.f32.mrb[0].mxu0
  %v172 = vadd.f32 0.0, %v171
  %v173 = vpop.f32.mrb[0].mxu0
  %174 = vmatprep.mubr.f32.mxu0 0.0
  %175 = vmatmul.mubr.f32.gmra.mrb[0].mxu0 %v53
  %v176 = vpop.f32.mrb[0].mxu0
  %v177 = vadd.f32 0.0, %v176
  %v178 = vpop.f32.mrb[0].mxu0
  %179 = vmatprep.mubr.f32.mxu0 0.0
  %180 = vmatmul.mubr.f32.gmra.mrb[0].mxu0 %v56
  %v181 = vpop.f32.mrb[0].mxu0
  %v182 = vadd.f32 0.0, %v181
  %v183 = vpop.f32.mrb[0].mxu0
  %184 = vmatprep.mubr.f32.mxu0 0.0
  %185 = vmatmul.mubr.f32.gmra.mrb[0].mxu0 %v59
  %v186 = vpop.f32.mrb[0].mxu0
  %v187 = vadd.f32 0.0, %v186
  %v188 = vpop.f32.mrb[0].mxu0
  %189 = vmatprep.mubr.f32.mxu0 0.0
  %190 = vmatmul.mubr.f32.gmra.mrb[0].mxu0 %v62
  %v191 = vpop.f32.mrb[0].mxu0
  %v192 = vadd.f32 0.0, %v191
  %v193 = vpop.f32.mrb[0].mxu0
  %194 = vmatprep.mubr.f32.mxu0 0.0
  %195 = vmatmul.mubr.f32.gmra.mrb[0].mxu0 %v65
  %v196 = vpop.f32.mrb[0].mxu0
  %v197 = vadd.f32 0.0, %v196
  %v198 = vpop.f32.mrb[0].mxu0
  %199 = vmatprep.mubr.f32.mxu0 0.0
  %200 = vmatmul.mubr.f32.gmra.mrb[0].mxu0 %v68
  %v201 = vpop.f32.mrb[0].mxu0
  %v202 = vadd.f32 0.0, %v201
  %v203 = vpop.f32.mrb[0].mxu0
  %204 = vmatprep.mubr.f32.mxu0 0.0
  %205 = vmatmul.mubr.f32.gmra.mrb[0].mxu0 %v71
  %v206 = vpop.f32.mrb[0].mxu0
  %v207 = vadd.f32 0.0, %v206
  %v208 = vpop.f32.mrb[0].mxu0
  %209 = vmatprep.mubr.f32.mxu0 0.0
  %210 = vmatmul.mubr.f32.gmra.mrb[0].mxu0 %v74
  %v211 = vpop.f32.mrb[0].mxu0
  %v212 = vadd.f32 0.0, %v211
  %v213 = vpop.f32.mrb[0].mxu0
  %214 = vmatprep.mubr.f32.mxu0 0.0
  %215 = vmatmul.mubr.f32.gmra.mrb[0].mxu0 %v77
  %v216 = vpop.f32.mrb[0].mxu0
  %v217 = vadd.f32 0.0, %v216
  %v218 = vpop.f32.mrb[0].mxu0
  %219 = vmatprep.mubr.f32.mxu0 0.0
  %220 = vmatmul.mubr.f32.gmra.mrb[0].mxu0 %v80
  %v221 = vpop.f32.mrb[0].mxu0
  %v222 = vadd.f32 0.0, %v221
  %v223 = vpop.f32.mrb[0].mxu0
  %224 = vmatprep.mubr.f32.mxu0 0.0
  %225 = vmatmul.mubr.f32.gmra.mrb[0].mxu0 %v83
  %v226 = vpop.f32.mrb[0].mxu0
  %v227 = vadd.f32 0.0, %v226
  %v228 = vpop.f32.mrb[0].mxu0
  %229 = vdwg.mxu0
  %v230 = vld [vmem:[%s2] sm:$0xff]
  %v231 = vld [vmem:[%s2 + $0x8] sm:$0xff]
  %v232 = vld [vmem:[%s2 + $0x10] sm:$0xff]
  %v233 = vld [vmem:[%s2 + $0x18] sm:$0xff]
  %234 = vmatprep.subr.mxu0 0.0
  %235 = vmatpush1.msra.mxu0 %v230
  %236 = vmatprep.subr.mxu0 0.0
  %237 = vmatpush1.msra.mxu0 %v231
  %238 = vmatprep.subr.mxu0 0.0
  %239 = vmatpush1.msra.mxu0 %v232
  %240 = vmatprep.subr.mxu0 0.0
  %241 = vmatpush1.msra.mxu0 %v233
  %242 = vmatprep.subr.mxu0 0.0
  %243 = vmatpush1.msra.mxu0 0.0
  %244 = vmatprep.subr.mxu0 0.0
  %245 = vmatpush1.msra.mxu0 0.0
  %246 = vmatprep.subr.mxu0 0.0
  %247 = vmatpush1.msra.mxu0 0.0
  %248 = vmatprep.subr.mxu0 0.0
  %249 = vmatpush1.msra.mxu0 0.0
  %250 = vmatprep.subr.mxu0 0.0
  %251 = vmatpush1.msra.mxu0 0.0
  %252 = vmatprep.subr.mxu0 0.0
  %253 = vmatpush1.msra.mxu0 0.0
  %254 = vmatprep.subr.mxu0 0.0
  %255 = vmatpush1.msra.mxu0 0.0
  %256 = vmatprep.subr.mxu0 0.0
  %257 = vmatpush1.msra.mxu0 0.0
  %258 = vmatprep.subr.mxu0 0.0
  %259 = vmatpush1.msra.mxu0 0.0
  %260 = vmatprep.subr.mxu0 0.0
  %261 = vmatpush1.msra.mxu0 0.0
  %262 = vmatprep.subr.mxu0 0.0
  %263 = vmatpush1.msra.mxu0 0.0
  %264 = vmatprep.subr.mxu0 0.0
  %265 = vmatpush1.msra.mxu0 0.0
  %266 = vmatprep.subr.mxu0 0.0
  %267 = vmatpush1.msra.mxu0 0.0
  %268 = vmatprep.subr.mxu0 0.0
  %269 = vmatpush1.msra.mxu0 0.0
  %270 = vmatprep.subr.mxu0 0.0
  %271 = vmatpush1.msra.mxu0 0.0
  %272 = vmatprep.subr.mxu0 0.0
  %273 = vmatpush1.msra.mxu0 0.0
  %274 = vmatprep.subr.mxu0 0.0
  %275 = vmatpush1.msra.mxu0 0.0
  %276 = vmatprep.subr.mxu0 0.0
  %277 = vmatpush1.msra.mxu0 0.0
  %278 = vmatprep.subr.mxu0 0.0
  %279 = vmatpush1.msra.mxu0 0.0
  %280 = vmatprep.subr.mxu0 0.0
  %281 = vmatpush1.msra.mxu0 0.0
  %282 = vmatprep.subr.mxu0 0.0
  %283 = vmatpush1.msra.mxu0 0.0
  %284 = vmatprep.subr.mxu0 0.0
  %285 = vmatpush1.msra.mxu0 0.0
  %286 = vmatprep.subr.mxu0 0.0
  %287 = vmatpush1.msra.mxu0 0.0
  %288 = vmatprep.subr.mxu0 0.0
  %289 = vmatpush1.msra.mxu0 0.0
  %290 = vmatprep.subr.mxu0 0.0
  %291 = vmatpush1.msra.mxu0 0.0
  %292 = vmatprep.subr.mxu0 0.0
  %293 = vmatpush1.msra.mxu0 0.0
  %294 = vmatprep.subr.mxu0 0.0
  %295 = vmatpush1.msra.mxu0 0.0
  %296 = vmatprep.subr.mxu0 0.0
  %297 = vmatpush1.msra.mxu0 0.0
  %298 = vmatprep.mubr.f32.mxu0 0.0
  %299 = vmatmul.mubr.f32.gmra.mrb[0].mxu0 %v38
  %v300 = vpop.f32.mrb[0].mxu0
  %v301 = vadd.f32 0.0, %v300
  %v302 = vpop.f32.mrb[0].mxu0
  %303 = vmatprep.mubr.f32.mxu0 0.0
  %304 = vmatmul.mubr.f32.gmra.mrb[0].mxu0 %v41
  %v305 = vpop.f32.mrb[0].mxu0
  %v306 = vadd.f32 0.0, %v305
  %v307 = vpop.f32.mrb[0].mxu0
  %308 = vmatprep.mubr.f32.mxu0 0.0
  %309 = vmatmul.mubr.f32.gmra.mrb[0].mxu0 %v44
  %v310 = vpop.f32.mrb[0].mxu0
  %v311 = vadd.f32 0.0, %v310
  %v312 = vpop.f32.mrb[0].mxu0
  %313 = vmatprep.mubr.f32.mxu0 0.0
  %314 = vmatmul.mubr.f32.gmra.mrb[0].mxu0 %v47
  %v315 = vpop.f32.mrb[0].mxu0
  %v316 = vadd.f32 0.0, %v315
  %v317 = vpop.f32.mrb[0].mxu0
  %318 = vmatprep.mubr.f32.mxu0 0.0
  %319 = vmatmul.mubr.f32.gmra.mrb[0].mxu0 %v50
  %v320 = vpop.f32.mrb[0].mxu0
  %v321 = vadd.f32 0.0, %v320
  %v322 = vpop.f32.mrb[0].mxu0
  %323 = vmatprep.mubr.f32.mxu0 0.0
  %324 = vmatmul.mubr.f32.gmra.mrb[0].mxu0 %v53
  %v325 = vpop.f32.mrb[0].mxu0
  %v326 = vadd.f32 0.0, %v325
  %v327 = vpop.f32.mrb[0].mxu0
  %328 = vmatprep.mubr.f32.mxu0 0.0
  %329 = vmatmul.mubr.f32.gmra.mrb[0].mxu0 %v56
  %v330 = vpop.f32.mrb[0].mxu0
  %v331 = vadd.f32 0.0, %v330
  %v332 = vpop.f32.mrb[0].mxu0
  %333 = vmatprep.mubr.f32.mxu0 0.0
  %334 = vmatmul.mubr.f32.gmra.mrb[0].mxu0 %v59
  %v335 = vpop.f32.mrb[0].mxu0
  %v336 = vadd.f32 0.0, %v335
  %v337 = vpop.f32.mrb[0].mxu0
  %338 = vmatprep.mubr.f32.mxu0 0.0
  %339 = vmatmul.mubr.f32.gmra.mrb[0].mxu0 %v62
  %v340 = vpop.f32.mrb[0].mxu0
  %v341 = vadd.f32 0.0, %v340
  %v342 = vpop.f32.mrb[0].mxu0
  %343 = vmatprep.mubr.f32.mxu0 0.0
  %344 = vmatmul.mubr.f32.gmra.mrb[0].mxu0 %v65
  %v345 = vpop.f32.mrb[0].mxu0
  %v346 = vadd.f32 0.0, %v345
  %v347 = vpop.f32.mrb[0].mxu0
  %348 = vmatprep.mubr.f32.mxu0 0.0
  %349 = vmatmul.mubr.f32.gmra.mrb[0].mxu0 %v68
  %v350 = vpop.f32.mrb[0].mxu0
  %v351 = vadd.f32 0.0, %v350
  %v352 = vpop.f32.mrb[0].mxu0
  %353 = vmatprep.mubr.f32.mxu0 0.0
  %354 = vmatmul.mubr.f32.gmra.mrb[0].mxu0 %v71
  %v355 = vpop.f32.mrb[0].mxu0
  %v356 = vadd.f32 0.0, %v355
  %v357 = vpop.f32.mrb[0].mxu0
  %358 = vmatprep.mubr.f32.mxu0 0.0
  %359 = vmatmul.mubr.f32.gmra.mrb[0].mxu0 %v74
  %v360 = vpop.f32.mrb[0].mxu0
  %v361 = vadd.f32 0.0, %v360
  %v362 = vpop.f32.mrb[0].mxu0
  %363 = vmatprep.mubr.f32.mxu0 0.0
  %364 = vmatmul.mubr.f32.gmra.mrb[0].mxu0 %v77
  %v365 = vpop.f32.mrb[0].mxu0
  %v366 = vadd.f32 0.0, %v365
  %v367 = vpop.f32.mrb[0].mxu0
  %368 = vmatprep.mubr.f32.mxu0 0.0
  %369 = vmatmul.mubr.f32.gmra.mrb[0].mxu0 %v80
  %v370 = vpop.f32.mrb[0].mxu0
  %v371 = vadd.f32 0.0, %v370
  %v372 = vpop.f32.mrb[0].mxu0
  %373 = vmatprep.mubr.f32.mxu0 0.0
  %374 = vmatmul.mubr.f32.gmra.mrb[0].mxu0 %v83
  %v375 = vpop.f32.mrb[0].mxu0
  %v376 = vadd.f32 0.0, %v375
  %v377 = vpop.f32.mrb[0].mxu0
  %378 = vdwg.mxu0
  %v379 = vpack.c.bf16 %v157, %v152
  %v380 = vpack.c.bf16 %v167, %v162
  %v381 = vpack.c.bf16 %v177, %v172
  %v382 = vpack.c.bf16 %v187, %v182
  %v383 = vpack.c.bf16 %v197, %v192
  %v384 = vpack.c.bf16 %v207, %v202
  %v385 = vpack.c.bf16 %v217, %v212
  %v386 = vpack.c.bf16 %v227, %v222
  %v395 = vunpack.c.l.b16 %v379
  %v396 = vunpack.c.h.b16 %v379
  %v397 = vunpack.c.l.b16 %v380
  %v398 = vunpack.c.h.b16 %v380
  %v399 = vunpack.c.l.b16 %v381
  %v400 = vunpack.c.h.b16 %v381
  %v401 = vunpack.c.l.b16 %v382
  %v402 = vunpack.c.h.b16 %v382
  %v403 = vunpack.c.l.b16 %v383
  %v404 = vunpack.c.h.b16 %v383
  %v405 = vunpack.c.l.b16 %v384
  %v406 = vunpack.c.h.b16 %v384
  %v407 = vunpack.c.l.b16 %v385
  %v408 = vunpack.c.h.b16 %v385
  %v409 = vunpack.c.l.b16 %v386
  %v410 = vunpack.c.h.b16 %v386
  %v411 = vpack.c.b16 %v395, %v395
  %v412 = vpack.c.b16 %v396, %v396
  %v413 = vpack.c.b16 %v397, %v397
  %v414 = vpack.c.b16 %v398, %v398
  %v415 = vpack.c.b16 %v399, %v399
  %v416 = vpack.c.b16 %v400, %v400
  %v417 = vpack.c.b16 %v401, %v401
  %v418 = vpack.c.b16 %v402, %v402
  %v419 = vpack.c.b16 %v403, %v403
  %v420 = vpack.c.b16 %v404, %v404
  %v421 = vpack.c.b16 %v405, %v405
  %v422 = vpack.c.b16 %v406, %v406
  %v423 = vpack.c.b16 %v407, %v407
  %v424 = vpack.c.b16 %v408, %v408
  %v425 = vpack.c.b16 %v409, %v409
  %v426 = vpack.c.b16 %v410, %v410
  %443 = vst [vmem:[%s3] sm:$0xf] %v411
  %444 = vst [vmem:[%s3 + $0x4] sm:$0xf] %v412
  %445 = vst [vmem:[%s3 + $0x8] sm:$0xf] %v413
  %446 = vst [vmem:[%s3 + $0xc] sm:$0xf] %v414
  %447 = vst [vmem:[%s3 + $0x10] sm:$0xf] %v415
  %448 = vst [vmem:[%s3 + $0x14] sm:$0xf] %v416
  %449 = vst [vmem:[%s3 + $0x18] sm:$0xf] %v417
  %450 = vst [vmem:[%s3 + $0x1c] sm:$0xf] %v418
  %451 = vst [vmem:[%s3 + $0x20] sm:$0xf] %v419
  %452 = vst [vmem:[%s3 + $0x24] sm:$0xf] %v420
  %453 = vst [vmem:[%s3 + $0x28] sm:$0xf] %v421
  %454 = vst [vmem:[%s3 + $0x2c] sm:$0xf] %v422
  %455 = vst [vmem:[%s3 + $0x30] sm:$0xf] %v423
  %456 = vst [vmem:[%s3 + $0x34] sm:$0xf] %v424
  %457 = vst [vmem:[%s3 + $0x38] sm:$0xf] %v425
  %458 = vst [vmem:[%s3 + $0x3c] sm:$0xf] %v426
  %459 = vst [vmem:[%s4] sm:$0xff] %v301
  %460 = vst [vmem:[%s4 + $0x8] sm:$0xff] %v306
  %461 = vst [vmem:[%s4 + $0x10] sm:$0xff] %v311
  %462 = vst [vmem:[%s4 + $0x18] sm:$0xff] %v316
  %463 = vst [vmem:[%s4 + $0x20] sm:$0xff] %v321
  %464 = vst [vmem:[%s4 + $0x28] sm:$0xff] %v326
  %465 = vst [vmem:[%s4 + $0x30] sm:$0xff] %v331
  %466 = vst [vmem:[%s4 + $0x38] sm:$0xff] %v336
  %467 = vst [vmem:[%s4 + $0x40] sm:$0xff] %v341
  %468 = vst [vmem:[%s4 + $0x48] sm:$0xff] %v346
  %469 = vst [vmem:[%s4 + $0x50] sm:$0xff] %v351
  %470 = vst [vmem:[%s4 + $0x58] sm:$0xff] %v356
  %471 = vst [vmem:[%s4 + $0x60] sm:$0xff] %v361
  %472 = vst [vmem:[%s4 + $0x68] sm:$0xff] %v366
  %473 = vst [vmem:[%s4 + $0x70] sm:$0xff] %v371
  %474 = vst [vmem:[%s4 + $0x78] sm:$0xff] %v376
  // Predicated region
  $region14: #{fairgnn_forward.2} parent=0 // pred_check
    _
  $region15: #{fairgnn_forward.2} parent=0 // pred_check_branch
    %476 = sbr.rel (0) target = $region17
  $region16: #{fairgnn_forward.2} parent=0 // pred_region
    _
  $region17: #{fairgnn_forward.2} parent=0 // pred_fallthru
    _
  // Predicated region
  $region18: #{fairgnn_forward.2} parent=0 // pred_check
    _
  $region19: #{fairgnn_forward.2} parent=0 // pred_check_branch
    %478 = sbr.rel (0) target = $region21
  $region20: #{fairgnn_forward.2} parent=0 // pred_region
    _
  $region21: #{fairgnn_forward.2} parent=0 // pred_fallthru
    _
  // Predicated region
  $region22: #{fairgnn_forward.2} parent=0 // pred_check
    _
  $region23: #{fairgnn_forward.2} parent=0 // pred_check_branch
    %480 = sbr.rel (0) target = $region25
  $region24: #{fairgnn_forward.2} parent=0 // pred_region
    _
  $region25: #{fairgnn_forward.2} parent=0 // pred_fallthru
    _
  // Predicated region
  $region26: #{fairgnn_forward.2} parent=0 // pred_check
    _
  $region27: #{fairgnn_forward.2} parent=0 // pred_check_branch
    %482 = sbr.rel (0) target = $region29
  $region28: #{fairgnn_forward.2} parent=0 // pred_region
    _
  $region29: #{fairgnn_forward.2} parent=0 // pred_fallthru
    _

// kernel: fairgnn_forward.3
$region0: #{fairgnn_forward.3}
  #allocation0 [shape = 'u32[]', space=smem, size = 0x4, offset = 0x4, fixed_abs, tag = 'smem constant byte address 0x4 - core index']
  #allocation1 [shape = 'u32[144,128]{1,0:T(1,128)}', space=vmem, size = 0x12000, scoped, tag = 'internal scratch']
  #allocation2 [shape = 'f32[128,128]{1,0:T(8,128)}', space=vmem, size = 0x10000, scoped, tag = 'scratch operand']
  %s0 = inlined_call_operand.vmem [shape: s8[128,128], index: 0, kind: input, shape index: {}]
  %s1 = inlined_call_operand.vmem [shape: bf16[128,128], index: 1, kind: input, shape index: {}]
  %s2 = inlined_call_operand.vmem [shape: f32[128,128], index: 2, kind: input, shape index: {}]
  %s3 = inlined_call_operand.vmem [shape: f32[128,1], index: 3, kind: input, shape index: {}]
  %s4 = inlined_call_operand.vmem [shape: f32[1,128], index: 4, kind: input, shape index: {}]
  %s5 = inlined_call_operand.vmem [shape: f32[1,128], index: 5, kind: input, shape index: {}]
  %s6 = inlined_call_operand.vmem [shape: f32[128,128], index: 6, kind: input, shape index: {}]
  %s7 = inlined_call_operand.vmem [shape: f32[1,128], index: 7, kind: input, shape index: {}]
  %s8 = inlined_call_operand.vmem [shape: f32[128,128], index: 8, kind: output, shape index: {}]
  %s9 = sld [smem:[#allocation0]]
  $region50: #{fairgnn_forward.3} parent=0
    _
  %s11 = ssub.s32 1, %s9
  %s12 = scalar_select 0, %s11, %s9
  // Predicated region
  $region2: #{fairgnn_forward.3} parent=0 // pred_check
    _
  $region3: #{fairgnn_forward.3} parent=0 // pred_check_branch
    %14 = sbr.rel (0) target = $region5
  $region4: #{fairgnn_forward.3} parent=0 // pred_region
    _
  $region5: #{fairgnn_forward.3} parent=0 // pred_fallthru
    _
  // Predicated region
  $region6: #{fairgnn_forward.3} parent=0 // pred_check
    _
  $region7: #{fairgnn_forward.3} parent=0 // pred_check_branch
    %16 = sbr.rel (0) target = $region9
  $region8: #{fairgnn_forward.3} parent=0 // pred_region
    _
  $region9: #{fairgnn_forward.3} parent=0 // pred_fallthru
    _
  // Predicated region
  $region10: #{fairgnn_forward.3} parent=0 // pred_check
    _
  $region11: #{fairgnn_forward.3} parent=0 // pred_check_branch
    %18 = sbr.rel (0) target = $region13
  $region12: #{fairgnn_forward.3} parent=0 // pred_region
    _
  $region13: #{fairgnn_forward.3} parent=0 // pred_fallthru
    _
  // Predicated region
  $region14: #{fairgnn_forward.3} parent=0 // pred_check
    _
  $region15: #{fairgnn_forward.3} parent=0 // pred_check_branch
    %20 = sbr.rel (0) target = $region17
  $region16: #{fairgnn_forward.3} parent=0 // pred_region
    _
  $region17: #{fairgnn_forward.3} parent=0 // pred_fallthru
    _
  // Predicated region
  $region18: #{fairgnn_forward.3} parent=0 // pred_check
    _
  $region19: #{fairgnn_forward.3} parent=0 // pred_check_branch
    %22 = sbr.rel (0) target = $region21
  $region20: #{fairgnn_forward.3} parent=0 // pred_region
    _
  $region21: #{fairgnn_forward.3} parent=0 // pred_fallthru
    _
  // Predicated region
  $region22: #{fairgnn_forward.3} parent=0 // pred_check
    _
  $region23: #{fairgnn_forward.3} parent=0 // pred_check_branch
    %24 = sbr.rel (0) target = $region25
  $region24: #{fairgnn_forward.3} parent=0 // pred_region
    _
  $region25: #{fairgnn_forward.3} parent=0 // pred_fallthru
    _
  // Predicated region
  $region26: #{fairgnn_forward.3} parent=0 // pred_check
    _
  $region27: #{fairgnn_forward.3} parent=0 // pred_check_branch
    %26 = sbr.rel (0) target = $region29
  $region28: #{fairgnn_forward.3} parent=0 // pred_region
    _
  $region29: #{fairgnn_forward.3} parent=0 // pred_fallthru
    _
  // Predicated region
  $region30: #{fairgnn_forward.3} parent=0 // pred_check
    _
  $region31: #{fairgnn_forward.3} parent=0 // pred_check_branch
    %28 = sbr.rel (0) target = $region33
  $region32: #{fairgnn_forward.3} parent=0 // pred_region
    _
  $region33: #{fairgnn_forward.3} parent=0 // pred_fallthru
    _
  %p30 = scmp.eq.s32.totalorder 0, 0
  // Predicated region
  $region34: #{fairgnn_forward.3} parent=0 // pred_check
    %p31 = pneg %p30
  $region35: #{fairgnn_forward.3} parent=0 // pred_check_branch
    %33 = sbr.rel (%p31) target = $region37
  $region36: #{fairgnn_forward.3} parent=0 // pred_region
    %34 = vst [vmem:[#allocation2] sm:$0xff] 0.0
    %35 = vst [vmem:[#allocation2 + $0x8] sm:$0xff] 0.0
    %36 = vst [vmem:[#allocation2 + $0x10] sm:$0xff] 0.0
    %37 = vst [vmem:[#allocation2 + $0x18] sm:$0xff] 0.0
    %38 = vst [vmem:[#allocation2 + $0x20] sm:$0xff] 0.0
    %39 = vst [vmem:[#allocation2 + $0x28] sm:$0xff] 0.0
    %40 = vst [vmem:[#allocation2 + $0x30] sm:$0xff] 0.0
    %41 = vst [vmem:[#allocation2 + $0x38] sm:$0xff] 0.0
    %42 = vst [vmem:[#allocation2 + $0x40] sm:$0xff] 0.0
    %43 = vst [vmem:[#allocation2 + $0x48] sm:$0xff] 0.0
    %44 = vst [vmem:[#allocation2 + $0x50] sm:$0xff] 0.0
    %45 = vst [vmem:[#allocation2 + $0x58] sm:$0xff] 0.0
    %46 = vst [vmem:[#allocation2 + $0x60] sm:$0xff] 0.0
    %47 = vst [vmem:[#allocation2 + $0x68] sm:$0xff] 0.0
    %48 = vst [vmem:[#allocation2 + $0x70] sm:$0xff] 0.0
    %49 = vst [vmem:[#allocation2 + $0x78] sm:$0xff] 0.0
  $region37: #{fairgnn_forward.3} parent=0 // pred_fallthru
    _
  %v50 = vld [vmem:[%s0] sm:$0xff]
  %v51 = vld [vmem:[%s0 + $0x8] sm:$0xff]
  %v52 = vld [vmem:[%s0 + $0x10] sm:$0xff]
  %v53 = vld [vmem:[%s0 + $0x18] sm:$0xff]
  %v54 = vunpack.c.l.s8.bf16 %v50
  %v55 = vunpack.c.h.s8.bf16 %v50
  %v56 = vunpack.c.l.s8.bf16 %v51
  %v57 = vunpack.c.h.s8.bf16 %v51
  %v58 = vunpack.c.l.s8.bf16 %v52
  %v59 = vunpack.c.h.s8.bf16 %v52
  %v60 = vunpack.c.l.s8.bf16 %v53
  %v61 = vunpack.c.h.s8.bf16 %v53
  %s62 = smul.u32 0, 128
  %s63 = sshra.s32 %s62, 3
  %s64 = sand.u32 %s62, 7
  %s65 = smul.addr %s63, 4
  %s66 = scalar_lea.vmem %s1, %s65
  %v67 = vld [vmem:[%s66] sm:$0xf]
  %v68 = vld [vmem:[%s66 + $0x4] sm:$0xf]
  %v69 = vld [vmem:[%s66 + $0x8] sm:$0xf]
  %v70 = vld [vmem:[%s66 + $0xc] sm:$0xf]
  %v71 = vld [vmem:[%s66 + $0x10] sm:$0xf]
  %v72 = vld [vmem:[%s66 + $0x14] sm:$0xf]
  %v73 = vld [vmem:[%s66 + $0x18] sm:$0xf]
  %v74 = vld [vmem:[%s66 + $0x1c] sm:$0xf]
  %v75 = vld [vmem:[%s66 + $0x20] sm:$0xf]
  %v76 = vld [vmem:[%s66 + $0x24] sm:$0xf]
  %v77 = vld [vmem:[%s66 + $0x28] sm:$0xf]
  %v78 = vld [vmem:[%s66 + $0x2c] sm:$0xf]
  %v79 = vld [vmem:[%s66 + $0x30] sm:$0xf]
  %v80 = vld [vmem:[%s66 + $0x34] sm:$0xf]
  %v81 = vld [vmem:[%s66 + $0x38] sm:$0xf]
  %v82 = vld [vmem:[%s66 + $0x3c] sm:$0xf]
  %v83 = vld [vmem:[#allocation2] sm:$0xff]
  %v84 = vld [vmem:[#allocation2 + $0x8] sm:$0xff]
  %v85 = vld [vmem:[#allocation2 + $0x10] sm:$0xff]
  %v86 = vld [vmem:[#allocation2 + $0x18] sm:$0xff]
  %v87 = vld [vmem:[#allocation2 + $0x20] sm:$0xff]
  %v88 = vld [vmem:[#allocation2 + $0x28] sm:$0xff]
  %v89 = vld [vmem:[#allocation2 + $0x30] sm:$0xff]
  %v90 = vld [vmem:[#allocation2 + $0x38] sm:$0xff]
  %v91 = vld [vmem:[#allocation2 + $0x40] sm:$0xff]
  %v92 = vld [vmem:[#allocation2 + $0x48] sm:$0xff]
  %v93 = vld [vmem:[#allocation2 + $0x50] sm:$0xff]
  %v94 = vld [vmem:[#allocation2 + $0x58] sm:$0xff]
  %v95 = vld [vmem:[#allocation2 + $0x60] sm:$0xff]
  %v96 = vld [vmem:[#allocation2 + $0x68] sm:$0xff]
  %v97 = vld [vmem:[#allocation2 + $0x70] sm:$0xff]
  %v98 = vld [vmem:[#allocation2 + $0x78] sm:$0xff]
  %v115 = vunpack.c.l.b16 %v67
  %v116 = vunpack.c.l.b16 %v68
  %v117 = vunpack.c.l.b16 %v69
  %v118 = vunpack.c.l.b16 %v70
  %v119 = vunpack.c.l.b16 %v71
  %v120 = vunpack.c.l.b16 %v72
  %v121 = vunpack.c.l.b16 %v73
  %v122 = vunpack.c.l.b16 %v74
  %v123 = vunpack.c.l.b16 %v75
  %v124 = vunpack.c.l.b16 %v76
  %v125 = vunpack.c.l.b16 %v77
  %v126 = vunpack.c.l.b16 %v78
  %v127 = vunpack.c.l.b16 %v79
  %v128 = vunpack.c.l.b16 %v80
  %v129 = vunpack.c.l.b16 %v81
  %v130 = vunpack.c.l.b16 %v82
  %v131 = vpack.c.b16 %v116, %v115
  %v132 = vpack.c.b16 %v118, %v117
  %v133 = vpack.c.b16 %v120, %v119
  %v134 = vpack.c.b16 %v122, %v121
  %v135 = vpack.c.b16 %v124, %v123
  %v136 = vpack.c.b16 %v126, %v125
  %v137 = vpack.c.b16 %v128, %v127
  %v138 = vpack.c.b16 %v130, %v129
  %147 = vmatprep.subr.bf16.mxu0 0
  %148 = vmatpush1.bf16.msra.mxu0 %v131
  %149 = vmatprep.subr.bf16.mxu0 0
  %150 = vmatpush1.bf16.msra.mxu0 %v132
  %151 = vmatprep.subr.bf16.mxu0 0
  %152 = vmatpush1.bf16.msra.mxu0 %v133
  %153 = vmatprep.subr.bf16.mxu0 0
  %154 = vmatpush1.bf16.msra.mxu0 %v134
  %155 = vmatprep.subr.bf16.mxu0 0
  %156 = vmatpush1.bf16.msra.mxu0 %v135
  %157 = vmatprep.subr.bf16.mxu0 0
  %158 = vmatpush1.bf16.msra.mxu0 %v136
  %159 = vmatprep.subr.bf16.mxu0 0
  %160 = vmatpush1.bf16.msra.mxu0 %v137
  %161 = vmatprep.subr.bf16.mxu0 0
  %162 = vmatpush1.bf16.msra.mxu0 %v138
  %163 = vmatprep.subr.bf16.mxu0 0
  %164 = vmatpush1.bf16.msra.mxu0 0
  %165 = vmatprep.subr.bf16.mxu0 0
  %166 = vmatpush1.bf16.msra.mxu0 0
  %167 = vmatprep.subr.bf16.mxu0 0
  %168 = vmatpush1.bf16.msra.mxu0 0
  %169 = vmatprep.subr.bf16.mxu0 0
  %170 = vmatpush1.bf16.msra.mxu0 0
  %171 = vmatprep.subr.bf16.mxu0 0
  %172 = vmatpush1.bf16.msra.mxu0 0
  %173 = vmatprep.subr.bf16.mxu0 0
  %174 = vmatpush1.bf16.msra.mxu0 0
  %175 = vmatprep.subr.bf16.mxu0 0
  %176 = vmatpush1.bf16.msra.mxu0 0
  %177 = vmatprep.subr.bf16.mxu0 0
  %178 = vmatpush1.bf16.msra.mxu0 0
  %179 = vmatprep.mubr.bf16.mxu0 0
  %180 = vmatmul.mubr.bf16.gmra.mrb[0].mxu0 %v54
  %v181 = vpop.f32.mrb[0].mxu0
  %v182 = vadd.f32 0.0, %v181
  %v183 = vpop.f32.mrb[0].mxu0
  %v184 = vpop.f32.mrb[0].mxu0
  %v185 = vadd.f32 0.0, %v184
  %v186 = vpop.f32.mrb[0].mxu0
  %187 = vmatprep.mubr.bf16.mxu0 0
  %188 = vmatmul.mubr.bf16.gmra.mrb[0].mxu0 %v55
  %v189 = vpop.f32.mrb[0].mxu0
  %v190 = vadd.f32 0.0, %v189
  %v191 = vpop.f32.mrb[0].mxu0
  %v192 = vpop.f32.mrb[0].mxu0
  %v193 = vadd.f32 0.0, %v192
  %v194 = vpop.f32.mrb[0].mxu0
  %195 = vmatprep.mubr.bf16.mxu0 0
  %196 = vmatmul.mubr.bf16.gmra.mrb[0].mxu0 %v56
  %v197 = vpop.f32.mrb[0].mxu0
  %v198 = vadd.f32 0.0, %v197
  %v199 = vpop.f32.mrb[0].mxu0
  %v200 = vpop.f32.mrb[0].mxu0
  %v201 = vadd.f32 0.0, %v200
  %v202 = vpop.f32.mrb[0].mxu0
  %203 = vmatprep.mubr.bf16.mxu0 0
  %204 = vmatmul.mubr.bf16.gmra.mrb[0].mxu0 %v57
  %v205 = vpop.f32.mrb[0].mxu0
  %v206 = vadd.f32 0.0, %v205
  %v207 = vpop.f32.mrb[0].mxu0
  %v208 = vpop.f32.mrb[0].mxu0
  %v209 = vadd.f32 0.0, %v208
  %v210 = vpop.f32.mrb[0].mxu0
  %211 = vmatprep.mubr.bf16.mxu0 0
  %212 = vmatmul.mubr.bf16.gmra.mrb[0].mxu0 %v58
  %v213 = vpop.f32.mrb[0].mxu0
  %v214 = vadd.f32 0.0, %v213
  %v215 = vpop.f32.mrb[0].mxu0
  %v216 = vpop.f32.mrb[0].mxu0
  %v217 = vadd.f32 0.0, %v216
  %v218 = vpop.f32.mrb[0].mxu0
  %219 = vmatprep.mubr.bf16.mxu0 0
  %220 = vmatmul.mubr.bf16.gmra.mrb[0].mxu0 %v59
  %v221 = vpop.f32.mrb[0].mxu0
  %v222 = vadd.f32 0.0, %v221
  %v223 = vpop.f32.mrb[0].mxu0
  %v224 = vpop.f32.mrb[0].mxu0
  %v225 = vadd.f32 0.0, %v224
  %v226 = vpop.f32.mrb[0].mxu0
  %227 = vmatprep.mubr.bf16.mxu0 0
  %228 = vmatmul.mubr.bf16.gmra.mrb[0].mxu0 %v60
  %v229 = vpop.f32.mrb[0].mxu0
  %v230 = vadd.f32 0.0, %v229
  %v231 = vpop.f32.mrb[0].mxu0
  %v232 = vpop.f32.mrb[0].mxu0
  %v233 = vadd.f32 0.0, %v232
  %v234 = vpop.f32.mrb[0].mxu0
  %235 = vmatprep.mubr.bf16.mxu0 0
  %236 = vmatmul.mubr.bf16.gmra.mrb[0].mxu0 %v61
  %v237 = vpop.f32.mrb[0].mxu0
  %v238 = vadd.f32 0.0, %v237
  %v239 = vpop.f32.mrb[0].mxu0
  %v240 = vpop.f32.mrb[0].mxu0
  %v241 = vadd.f32 0.0, %v240
  %v242 = vpop.f32.mrb[0].mxu0
  %243 = vdwg.mxu0
  %v244 = vadd.f32 %v83, %v182
  %v245 = vadd.f32 %v84, %v185
  %v246 = vadd.f32 %v85, %v190
  %v247 = vadd.f32 %v86, %v193
  %v248 = vadd.f32 %v87, %v198
  %v249 = vadd.f32 %v88, %v201
  %v250 = vadd.f32 %v89, %v206
  %v251 = vadd.f32 %v90, %v209
  %v252 = vadd.f32 %v91, %v214
  %v253 = vadd.f32 %v92, %v217
  %v254 = vadd.f32 %v93, %v222
  %v255 = vadd.f32 %v94, %v225
  %v256 = vadd.f32 %v95, %v230
  %v257 = vadd.f32 %v96, %v233
  %v258 = vadd.f32 %v97, %v238
  %v259 = vadd.f32 %v98, %v241
  %260 = vst [vmem:[#allocation2] sm:$0xff] %v244
  %261 = vst [vmem:[#allocation2 + $0x8] sm:$0xff] %v245
  %262 = vst [vmem:[#allocation2 + $0x10] sm:$0xff] %v246
  %263 = vst [vmem:[#allocation2 + $0x18] sm:$0xff] %v247
  %264 = vst [vmem:[#allocation2 + $0x20] sm:$0xff] %v248
  %265 = vst [vmem:[#allocation2 + $0x28] sm:$0xff] %v249
  %266 = vst [vmem:[#allocation2 + $0x30] sm:$0xff] %v250
  %267 = vst [vmem:[#allocation2 + $0x38] sm:$0xff] %v251
  %268 = vst [vmem:[#allocation2 + $0x40] sm:$0xff] %v252
  %269 = vst [vmem:[#allocation2 + $0x48] sm:$0xff] %v253
  %270 = vst [vmem:[#allocation2 + $0x50] sm:$0xff] %v254
  %271 = vst [vmem:[#allocation2 + $0x58] sm:$0xff] %v255
  %272 = vst [vmem:[#allocation2 + $0x60] sm:$0xff] %v256
  %273 = vst [vmem:[#allocation2 + $0x68] sm:$0xff] %v257
  %274 = vst [vmem:[#allocation2 + $0x70] sm:$0xff] %v258
  %275 = vst [vmem:[#allocation2 + $0x78] sm:$0xff] %v259
  // Predicated region
  $region38: #{fairgnn_forward.3} parent=0 // pred_check
    %p276 = pneg %p30
  $region39: #{fairgnn_forward.3} parent=0 // pred_check_branch
    %278 = sbr.rel (%p276) target = $region41
  $region40: #{fairgnn_forward.3} parent=0 // pred_region
    %v279 = vld [vmem:[#allocation2] sm:$0xff]
    %v280 = vld [vmem:[#allocation2 + $0x8] sm:$0xff]
    %v281 = vld [vmem:[#allocation2 + $0x10] sm:$0xff]
    %v282 = vld [vmem:[#allocation2 + $0x18] sm:$0xff]
    %v283 = vld [vmem:[#allocation2 + $0x20] sm:$0xff]
    %v284 = vld [vmem:[#allocation2 + $0x28] sm:$0xff]
    %v285 = vld [vmem:[#allocation2 + $0x30] sm:$0xff]
    %v286 = vld [vmem:[#allocation2 + $0x38] sm:$0xff]
    %v287 = vld [vmem:[#allocation2 + $0x40] sm:$0xff]
    %v288 = vld [vmem:[#allocation2 + $0x48] sm:$0xff]
    %v289 = vld [vmem:[#allocation2 + $0x50] sm:$0xff]
    %v290 = vld [vmem:[#allocation2 + $0x58] sm:$0xff]
    %v291 = vld [vmem:[#allocation2 + $0x60] sm:$0xff]
    %v292 = vld [vmem:[#allocation2 + $0x68] sm:$0xff]
    %v293 = vld [vmem:[#allocation2 + $0x70] sm:$0xff]
    %v294 = vld [vmem:[#allocation2 + $0x78] sm:$0xff]
    %v295 = vld [vmem:[%s3] sm:$0xff]
    %v296 = vld [vmem:[%s3 + $0x8] sm:$0xff]
    %v297 = vld [vmem:[%s3 + $0x10] sm:$0xff]
    %v298 = vld [vmem:[%s3 + $0x18] sm:$0xff]
    %v299 = vld [vmem:[%s3 + $0x20] sm:$0xff]
    %v300 = vld [vmem:[%s3 + $0x28] sm:$0xff]
    %v301 = vld [vmem:[%s3 + $0x30] sm:$0xff]
    %v302 = vld [vmem:[%s3 + $0x38] sm:$0xff]
    %v303 = vld [vmem:[%s3 + $0x40] sm:$0xff]
    %v304 = vld [vmem:[%s3 + $0x48] sm:$0xff]
    %v305 = vld [vmem:[%s3 + $0x50] sm:$0xff]
    %v306 = vld [vmem:[%s3 + $0x58] sm:$0xff]
    %v307 = vld [vmem:[%s3 + $0x60] sm:$0xff]
    %v308 = vld [vmem:[%s3 + $0x68] sm:$0xff]
    %v309 = vld [vmem:[%s3 + $0x70] sm:$0xff]
    %v310 = vld [vmem:[%s3 + $0x78] sm:$0xff]
    %312 = vset.pattern.permute.xlu0 0
    %313 = vperm.xlu0 %312, %v295
    %v314 = vpop.permute.xlu0 %313
    %317 = vset.pattern.permute.xlu0 0
    %318 = vperm.xlu0 %317, %v296
    %v319 = vpop.permute.xlu0 %318
    %322 = vset.pattern.permute.xlu0 0
    %323 = vperm.xlu0 %322, %v297
    %v324 = vpop.permute.xlu0 %323
    %327 = vset.pattern.permute.xlu0 0
    %328 = vperm.xlu0 %327, %v298
    %v329 = vpop.permute.xlu0 %328
    %332 = vset.pattern.permute.xlu0 0
    %333 = vperm.xlu0 %332, %v299
    %v334 = vpop.permute.xlu0 %333
    %337 = vset.pattern.permute.xlu0 0
    %338 = vperm.xlu0 %337, %v300
    %v339 = vpop.permute.xlu0 %338
    %342 = vset.pattern.permute.xlu0 0
    %343 = vperm.xlu0 %342, %v301
    %v344 = vpop.permute.xlu0 %343
    %347 = vset.pattern.permute.xlu0 0
    %348 = vperm.xlu0 %347, %v302
    %v349 = vpop.permute.xlu0 %348
    %352 = vset.pattern.permute.xlu0 0
    %353 = vperm.xlu0 %352, %v303
    %v354 = vpop.permute.xlu0 %353
    %357 = vset.pattern.permute.xlu0 0
    %358 = vperm.xlu0 %357, %v304
    %v359 = vpop.permute.xlu0 %358
    %362 = vset.pattern.permute.xlu0 0
    %363 = vperm.xlu0 %362, %v305
    %v364 = vpop.permute.xlu0 %363
    %367 = vset.pattern.permute.xlu0 0
    %368 = vperm.xlu0 %367, %v306
    %v369 = vpop.permute.xlu0 %368
    %372 = vset.pattern.permute.xlu0 0
    %373 = vperm.xlu0 %372, %v307
    %v374 = vpop.permute.xlu0 %373
    %377 = vset.pattern.permute.xlu0 0
    %378 = vperm.xlu0 %377, %v308
    %v379 = vpop.permute.xlu0 %378
    %382 = vset.pattern.permute.xlu0 0
    %383 = vperm.xlu0 %382, %v309
    %v384 = vpop.permute.xlu0 %383
    %387 = vset.pattern.permute.xlu0 0
    %388 = vperm.xlu0 %387, %v310
    %v389 = vpop.permute.xlu0 %388
    %v391 = vmul.f32 %v279, %v314
    %v392 = vmul.f32 %v280, %v319
    %v393 = vmul.f32 %v281, %v324
    %v394 = vmul.f32 %v282, %v329
    %v395 = vmul.f32 %v283, %v334
    %v396 = vmul.f32 %v284, %v339
    %v397 = vmul.f32 %v285, %v344
    %v398 = vmul.f32 %v286, %v349
    %v399 = vmul.f32 %v287, %v354
    %v400 = vmul.f32 %v288, %v359
    %v401 = vmul.f32 %v289, %v364
    %v402 = vmul.f32 %v290, %v369
    %v403 = vmul.f32 %v291, %v374
    %v404 = vmul.f32 %v292, %v379
    %v405 = vmul.f32 %v293, %v384
    %v406 = vmul.f32 %v294, %v389
    %v407 = vld [vmem:[%s2] sm:$0xff]
    %v408 = vld [vmem:[%s2 + $0x8] sm:$0xff]
    %v409 = vld [vmem:[%s2 + $0x10] sm:$0xff]
    %v410 = vld [vmem:[%s2 + $0x18] sm:$0xff]
    %v411 = vld [vmem:[%s2 + $0x20] sm:$0xff]
    %v412 = vld [vmem:[%s2 + $0x28] sm:$0xff]
    %v413 = vld [vmem:[%s2 + $0x30] sm:$0xff]
    %v414 = vld [vmem:[%s2 + $0x38] sm:$0xff]
    %v415 = vld [vmem:[%s2 + $0x40] sm:$0xff]
    %v416 = vld [vmem:[%s2 + $0x48] sm:$0xff]
    %v417 = vld [vmem:[%s2 + $0x50] sm:$0xff]
    %v418 = vld [vmem:[%s2 + $0x58] sm:$0xff]
    %v419 = vld [vmem:[%s2 + $0x60] sm:$0xff]
    %v420 = vld [vmem:[%s2 + $0x68] sm:$0xff]
    %v421 = vld [vmem:[%s2 + $0x70] sm:$0xff]
    %v422 = vld [vmem:[%s2 + $0x78] sm:$0xff]
    %v423 = vadd.f32 %v391, %v407
    %v424 = vadd.f32 %v392, %v408
    %v425 = vadd.f32 %v393, %v409
    %v426 = vadd.f32 %v394, %v410
    %v427 = vadd.f32 %v395, %v411
    %v428 = vadd.f32 %v396, %v412
    %v429 = vadd.f32 %v397, %v413
    %v430 = vadd.f32 %v398, %v414
    %v431 = vadd.f32 %v399, %v415
    %v432 = vadd.f32 %v400, %v416
    %v433 = vadd.f32 %v401, %v417
    %v434 = vadd.f32 %v402, %v418
    %v435 = vadd.f32 %v403, %v419
    %v436 = vadd.f32 %v404, %v420
    %v437 = vadd.f32 %v405, %v421
    %v438 = vadd.f32 %v406, %v422
    %v439 = vld [vmem:[%s4] sm:$0x1]
    %v441 = vlaneseq
    %v442 = vshrl.u32 %v441, 7
    %v443 = vsub.s32 0, %v442
    %v444 = vrot.slane %v439, %v443
    %v446 = vadd.f32 %v423, %v444
    %v447 = vadd.f32 %v424, %v444
    %v448 = vadd.f32 %v425, %v444
    %v449 = vadd.f32 %v426, %v444
    %v450 = vadd.f32 %v427, %v444
    %v451 = vadd.f32 %v428, %v444
    %v452 = vadd.f32 %v429, %v444
    %v453 = vadd.f32 %v430, %v444
    %v454 = vadd.f32 %v431, %v444
    %v455 = vadd.f32 %v432, %v444
    %v456 = vadd.f32 %v433, %v444
    %v457 = vadd.f32 %v434, %v444
    %v458 = vadd.f32 %v435, %v444
    %v459 = vadd.f32 %v436, %v444
    %v460 = vadd.f32 %v437, %v444
    %v461 = vadd.f32 %v438, %v444
    %v462 = vmul.f32 %v446, %v446
    %v463 = vmul.f32 %v447, %v447
    %v464 = vmul.f32 %v448, %v448
    %v465 = vmul.f32 %v449, %v449
    %v466 = vmul.f32 %v450, %v450
    %v467 = vmul.f32 %v451, %v451
    %v468 = vmul.f32 %v452, %v452
    %v469 = vmul.f32 %v453, %v453
    %v470 = vmul.f32 %v454, %v454
    %v471 = vmul.f32 %v455, %v455
    %v472 = vmul.f32 %v456, %v456
    %v473 = vmul.f32 %v457, %v457
    %v474 = vmul.f32 %v458, %v458
    %v475 = vmul.f32 %v459, %v459
    %v476 = vmul.f32 %v460, %v460
    %v477 = vmul.f32 %v461, %v461
    %478 = vadd.xlane.f32.xlu0 %v462
    %v479 = vpop.xlane.xlu0 %478
    %480 = vadd.xlane.f32.xlu0 %v463
    %v481 = vpop.xlane.xlu0 %480
    %482 = vadd.xlane.f32.xlu0 %v464
    %v483 = vpop.xlane.xlu0 %482
    %484 = vadd.xlane.f32.xlu0 %v465
    %v485 = vpop.xlane.xlu0 %484
    %486 = vadd.xlane.f32.xlu0 %v466
    %v487 = vpop.xlane.xlu0 %486
    %488 = vadd.xlane.f32.xlu0 %v467
    %v489 = vpop.xlane.xlu0 %488
    %490 = vadd.xlane.f32.xlu0 %v468
    %v491 = vpop.xlane.xlu0 %490
    %492 = vadd.xlane.f32.xlu0 %v469
    %v493 = vpop.xlane.xlu0 %492
    %494 = vadd.xlane.f32.xlu0 %v470
    %v495 = vpop.xlane.xlu0 %494
    %496 = vadd.xlane.f32.xlu0 %v471
    %v497 = vpop.xlane.xlu0 %496
    %498 = vadd.xlane.f32.xlu0 %v472
    %v499 = vpop.xlane.xlu0 %498
    %500 = vadd.xlane.f32.xlu0 %v473
    %v501 = vpop.xlane.xlu0 %500
    %502 = vadd.xlane.f32.xlu0 %v474
    %v503 = vpop.xlane.xlu0 %502
    %504 = vadd.xlane.f32.xlu0 %v475
    %v505 = vpop.xlane.xlu0 %504
    %506 = vadd.xlane.f32.xlu0 %v476
    %v507 = vpop.xlane.xlu0 %506
    %508 = vadd.xlane.f32.xlu0 %v477
    %v509 = vpop.xlane.xlu0 %508
    %v510 = vmax.f32 %v462, 1e-24
    %v511 = vmax.f32 %v463, 1e-24
    %v512 = vmax.f32 %v464, 1e-24
    %v513 = vmax.f32 %v465, 1e-24
    %v514 = vmax.f32 %v466, 1e-24
    %v515 = vmax.f32 %v467, 1e-24
    %v516 = vmax.f32 %v468, 1e-24
    %v517 = vmax.f32 %v469, 1e-24
    %v518 = vmax.f32 %v470, 1e-24
    %v519 = vmax.f32 %v471, 1e-24
    %v520 = vmax.f32 %v472, 1e-24
    %v521 = vmax.f32 %v473, 1e-24
    %v522 = vmax.f32 %v474, 1e-24
    %v523 = vmax.f32 %v475, 1e-24
    %v524 = vmax.f32 %v476, 1e-24
    %v525 = vmax.f32 %v477, 1e-24
    %v526 = vrsqrt.pop %v510
    %v527 = vrsqrt.pop %v511
    %v528 = vrsqrt.pop %v512
    %v529 = vrsqrt.pop %v513
    %v530 = vrsqrt.pop %v514
    %v531 = vrsqrt.pop %v515
    %v532 = vrsqrt.pop %v516
    %v533 = vrsqrt.pop %v517
    %v534 = vrsqrt.pop %v518
    %v535 = vrsqrt.pop %v519
    %v536 = vrsqrt.pop %v520
    %v537 = vrsqrt.pop %v521
    %v538 = vrsqrt.pop %v522
    %v539 = vrsqrt.pop %v523
    %v540 = vrsqrt.pop %v524
    %v541 = vrsqrt.pop %v525
    %v542 = vsub.f32 %v479, %v462
    %v543 = vsub.f32 %v481, %v463
    %v544 = vsub.f32 %v483, %v464
    %v545 = vsub.f32 %v485, %v465
    %v546 = vsub.f32 %v487, %v466
    %v547 = vsub.f32 %v489, %v467
    %v548 = vsub.f32 %v491, %v468
    %v549 = vsub.f32 %v493, %v469
    %v550 = vsub.f32 %v495, %v470
    %v551 = vsub.f32 %v497, %v471
    %v552 = vsub.f32 %v499, %v472
    %v553 = vsub.f32 %v501, %v473
    %v554 = vsub.f32 %v503, %v474
    %v555 = vsub.f32 %v505, %v475
    %v556 = vsub.f32 %v507, %v476
    %v557 = vsub.f32 %v509, %v477
    %v558 = vmax.f32 %v542, 1e-24
    %v559 = vmax.f32 %v543, 1e-24
    %v560 = vmax.f32 %v544, 1e-24
    %v561 = vmax.f32 %v545, 1e-24
    %v562 = vmax.f32 %v546, 1e-24
    %v563 = vmax.f32 %v547, 1e-24
    %v564 = vmax.f32 %v548, 1e-24
    %v565 = vmax.f32 %v549, 1e-24
    %v566 = vmax.f32 %v550, 1e-24
    %v567 = vmax.f32 %v551, 1e-24
    %v568 = vmax.f32 %v552, 1e-24
    %v569 = vmax.f32 %v553, 1e-24
    %v570 = vmax.f32 %v554, 1e-24
    %v571 = vmax.f32 %v555, 1e-24
    %v572 = vmax.f32 %v556, 1e-24
    %v573 = vmax.f32 %v557, 1e-24
    %v574 = vrsqrt.pop %v558
    %v575 = vrsqrt.pop %v559
    %v576 = vrsqrt.pop %v560
    %v577 = vrsqrt.pop %v561
    %v578 = vrsqrt.pop %v562
    %v579 = vrsqrt.pop %v563
    %v580 = vrsqrt.pop %v564
    %v581 = vrsqrt.pop %v565
    %v582 = vrsqrt.pop %v566
    %v583 = vrsqrt.pop %v567
    %v584 = vrsqrt.pop %v568
    %v585 = vrsqrt.pop %v569
    %v586 = vrsqrt.pop %v570
    %v587 = vrsqrt.pop %v571
    %v588 = vrsqrt.pop %v572
    %v589 = vrsqrt.pop %v573
    %v590 = vld [vmem:[%s5] sm:$0x1]
    %v592 = vlaneseq
    %v593 = vshrl.u32 %v592, 7
    %v594 = vsub.s32 0, %v593
    %v595 = vrot.slane %v590, %v594
    %598 = vset.pattern.permute.xlu0 0
    %599 = vperm.xlu0 %598, %v526
    %v600 = vpop.permute.xlu0 %599
    %603 = vset.pattern.permute.xlu0 0
    %604 = vperm.xlu0 %603, %v527
    %v605 = vpop.permute.xlu0 %604
    %608 = vset.pattern.permute.xlu0 0
    %609 = vperm.xlu0 %608, %v528
    %v610 = vpop.permute.xlu0 %609
    %613 = vset.pattern.permute.xlu0 0
    %614 = vperm.xlu0 %613, %v529
    %v615 = vpop.permute.xlu0 %614
    %618 = vset.pattern.permute.xlu0 0
    %619 = vperm.xlu0 %618, %v530
    %v620 = vpop.permute.xlu0 %619
    %623 = vset.pattern.permute.xlu0 0
    %624 = vperm.xlu0 %623, %v531
    %v625 = vpop.permute.xlu0 %624
    %628 = vset.pattern.permute.xlu0 0
    %629 = vperm.xlu0 %628, %v532
    %v630 = vpop.permute.xlu0 %629
    %633 = vset.pattern.permute.xlu0 0
    %634 = vperm.xlu0 %633, %v533
    %v635 = vpop.permute.xlu0 %634
    %638 = vset.pattern.permute.xlu0 0
    %639 = vperm.xlu0 %638, %v534
    %v640 = vpop.permute.xlu0 %639
    %643 = vset.pattern.permute.xlu0 0
    %644 = vperm.xlu0 %643, %v535
    %v645 = vpop.permute.xlu0 %644
    %648 = vset.pattern.permute.xlu0 0
    %649 = vperm.xlu0 %648, %v536
    %v650 = vpop.permute.xlu0 %649
    %653 = vset.pattern.permute.xlu0 0
    %654 = vperm.xlu0 %653, %v537
    %v655 = vpop.permute.xlu0 %654
    %658 = vset.pattern.permute.xlu0 0
    %659 = vperm.xlu0 %658, %v538
    %v660 = vpop.permute.xlu0 %659
    %663 = vset.pattern.permute.xlu0 0
    %664 = vperm.xlu0 %663, %v539
    %v665 = vpop.permute.xlu0 %664
    %668 = vset.pattern.permute.xlu0 0
    %669 = vperm.xlu0 %668, %v540
    %v670 = vpop.permute.xlu0 %669
    %673 = vset.pattern.permute.xlu0 0
    %674 = vperm.xlu0 %673, %v541
    %v675 = vpop.permute.xlu0 %674
    %v677 = vmul.f32 %v595, %v600
    %v678 = vmul.f32 %v595, %v605
    %v679 = vmul.f32 %v595, %v610
    %v680 = vmul.f32 %v595, %v615
    %v681 = vmul.f32 %v595, %v620
    %v682 = vmul.f32 %v595, %v625
    %v683 = vmul.f32 %v595, %v630
    %v684 = vmul.f32 %v595, %v635
    %v685 = vmul.f32 %v595, %v640
    %v686 = vmul.f32 %v595, %v645
    %v687 = vmul.f32 %v595, %v650
    %v688 = vmul.f32 %v595, %v655
    %v689 = vmul.f32 %v595, %v660
    %v690 = vmul.f32 %v595, %v665
    %v691 = vmul.f32 %v595, %v670
    %v692 = vmul.f32 %v595, %v675
    %v693 = vsub.f32 1.0, %v590
    %v695 = vlaneseq
    %v696 = vshrl.u32 %v695, 7
    %v697 = vsub.s32 0, %v696
    %v698 = vrot.slane %v693, %v697
    %701 = vset.pattern.permute.xlu0 0
    %702 = vperm.xlu0 %701, %v574
    %v703 = vpop.permute.xlu0 %702
    %706 = vset.pattern.permute.xlu0 0
    %707 = vperm.xlu0 %706, %v575
    %v708 = vpop.permute.xlu0 %707
    %711 = vset.pattern.permute.xlu0 0
    %712 = vperm.xlu0 %711, %v576
    %v713 = vpop.permute.xlu0 %712
    %716 = vset.pattern.permute.xlu0 0
    %717 = vperm.xlu0 %716, %v577
    %v718 = vpop.permute.xlu0 %717
    %721 = vset.pattern.permute.xlu0 0
    %722 = vperm.xlu0 %721, %v578
    %v723 = vpop.permute.xlu0 %722
    %726 = vset.pattern.permute.xlu0 0
    %727 = vperm.xlu0 %726, %v579
    %v728 = vpop.permute.xlu0 %727
    %731 = vset.pattern.permute.xlu0 0
    %732 = vperm.xlu0 %731, %v580
    %v733 = vpop.permute.xlu0 %732
    %736 = vset.pattern.permute.xlu0 0
    %737 = vperm.xlu0 %736, %v581
    %v738 = vpop.permute.xlu0 %737
    %741 = vset.pattern.permute.xlu0 0
    %742 = vperm.xlu0 %741, %v582
    %v743 = vpop.permute.xlu0 %742
    %746 = vset.pattern.permute.xlu0 0
    %747 = vperm.xlu0 %746, %v583
    %v748 = vpop.permute.xlu0 %747
    %751 = vset.pattern.permute.xlu0 0
    %752 = vperm.xlu0 %751, %v584
    %v753 = vpop.permute.xlu0 %752
    %756 = vset.pattern.permute.xlu0 0
    %757 = vperm.xlu0 %756, %v585
    %v758 = vpop.permute.xlu0 %757
    %761 = vset.pattern.permute.xlu0 0
    %762 = vperm.xlu0 %761, %v586
    %v763 = vpop.permute.xlu0 %762
    %766 = vset.pattern.permute.xlu0 0
    %767 = vperm.xlu0 %766, %v587
    %v768 = vpop.permute.xlu0 %767
    %771 = vset.pattern.permute.xlu0 0
    %772 = vperm.xlu0 %771, %v588
    %v773 = vpop.permute.xlu0 %772
    %776 = vset.pattern.permute.xlu0 0
    %777 = vperm.xlu0 %776, %v589
    %v778 = vpop.permute.xlu0 %777
    %v780 = vmul.f32 %v698, %v703
    %v781 = vmul.f32 %v698, %v708
    %v782 = vmul.f32 %v698, %v713
    %v783 = vmul.f32 %v698, %v718
    %v784 = vmul.f32 %v698, %v723
    %v785 = vmul.f32 %v698, %v728
    %v786 = vmul.f32 %v698, %v733
    %v787 = vmul.f32 %v698, %v738
    %v788 = vmul.f32 %v698, %v743
    %v789 = vmul.f32 %v698, %v748
    %v790 = vmul.f32 %v698, %v753
    %v791 = vmul.f32 %v698, %v758
    %v792 = vmul.f32 %v698, %v763
    %v793 = vmul.f32 %v698, %v768
    %v794 = vmul.f32 %v698, %v773
    %v795 = vmul.f32 %v698, %v778
    %v796 = vadd.f32 %v677, %v780
    %v797 = vadd.f32 %v678, %v781
    %v798 = vadd.f32 %v679, %v782
    %v799 = vadd.f32 %v680, %v783
    %v800 = vadd.f32 %v681, %v784
    %v801 = vadd.f32 %v682, %v785
    %v802 = vadd.f32 %v683, %v786
    %v803 = vadd.f32 %v684, %v787
    %v804 = vadd.f32 %v685, %v788
    %v805 = vadd.f32 %v686, %v789
    %v806 = vadd.f32 %v687, %v790
    %v807 = vadd.f32 %v688, %v791
    %v808 = vadd.f32 %v689, %v792
    %v809 = vadd.f32 %v690, %v793
    %v810 = vadd.f32 %v691, %v794
    %v811 = vadd.f32 %v692, %v795
    %v812 = vmul.f32 %v796, 0.999995
    %v813 = vmul.f32 %v797, 0.999995
    %v814 = vmul.f32 %v798, 0.999995
    %v815 = vmul.f32 %v799, 0.999995
    %v816 = vmul.f32 %v800, 0.999995
    %v817 = vmul.f32 %v801, 0.999995
    %v818 = vmul.f32 %v802, 0.999995
    %v819 = vmul.f32 %v803, 0.999995
    %v820 = vmul.f32 %v804, 0.999995
    %v821 = vmul.f32 %v805, 0.999995
    %v822 = vmul.f32 %v806, 0.999995
    %v823 = vmul.f32 %v807, 0.999995
    %v824 = vmul.f32 %v808, 0.999995
    %v825 = vmul.f32 %v809, 0.999995
    %v826 = vmul.f32 %v810, 0.999995
    %v827 = vmul.f32 %v811, 0.999995
    %v828 = vmax.f32 %v446, 0.0
    %v829 = vmax.f32 %v447, 0.0
    %v830 = vmax.f32 %v448, 0.0
    %v831 = vmax.f32 %v449, 0.0
    %v832 = vmax.f32 %v450, 0.0
    %v833 = vmax.f32 %v451, 0.0
    %v834 = vmax.f32 %v452, 0.0
    %v835 = vmax.f32 %v453, 0.0
    %v836 = vmax.f32 %v454, 0.0
    %v837 = vmax.f32 %v455, 0.0
    %v838 = vmax.f32 %v456, 0.0
    %v839 = vmax.f32 %v457, 0.0
    %v840 = vmax.f32 %v458, 0.0
    %v841 = vmax.f32 %v459, 0.0
    %v842 = vmax.f32 %v460, 0.0
    %v843 = vmax.f32 %v461, 0.0
    %v844 = vmul.f32 %v828, %v812
    %v845 = vmul.f32 %v829, %v813
    %v846 = vmul.f32 %v830, %v814
    %v847 = vmul.f32 %v831, %v815
    %v848 = vmul.f32 %v832, %v816
    %v849 = vmul.f32 %v833, %v817
    %v850 = vmul.f32 %v834, %v818
    %v851 = vmul.f32 %v835, %v819
    %v852 = vmul.f32 %v836, %v820
    %v853 = vmul.f32 %v837, %v821
    %v854 = vmul.f32 %v838, %v822
    %v855 = vmul.f32 %v839, %v823
    %v856 = vmul.f32 %v840, %v824
    %v857 = vmul.f32 %v841, %v825
    %v858 = vmul.f32 %v842, %v826
    %v859 = vmul.f32 %v843, %v827
    %v860 = vld [vmem:[%s6] sm:$0xff]
    %v861 = vld [vmem:[%s6 + $0x8] sm:$0xff]
    %v862 = vld [vmem:[%s6 + $0x10] sm:$0xff]
    %v863 = vld [vmem:[%s6 + $0x18] sm:$0xff]
    %v864 = vld [vmem:[%s6 + $0x20] sm:$0xff]
    %v865 = vld [vmem:[%s6 + $0x28] sm:$0xff]
    %v866 = vld [vmem:[%s6 + $0x30] sm:$0xff]
    %v867 = vld [vmem:[%s6 + $0x38] sm:$0xff]
    %v868 = vld [vmem:[%s6 + $0x40] sm:$0xff]
    %v869 = vld [vmem:[%s6 + $0x48] sm:$0xff]
    %v870 = vld [vmem:[%s6 + $0x50] sm:$0xff]
    %v871 = vld [vmem:[%s6 + $0x58] sm:$0xff]
    %v872 = vld [vmem:[%s6 + $0x60] sm:$0xff]
    %v873 = vld [vmem:[%s6 + $0x68] sm:$0xff]
    %v874 = vld [vmem:[%s6 + $0x70] sm:$0xff]
    %v875 = vld [vmem:[%s6 + $0x78] sm:$0xff]
    %v876 = vld [vmem:[%s7] sm:$0x1]
    %v878 = vlaneseq
    %v879 = vshrl.u32 %v878, 7
    %v880 = vsub.s32 0, %v879
    %v881 = vrot.slane %v876, %v880
    %883 = vmatprep.subr.mxu0 0.0
    %884 = vmatpush1.msra.mxu0 %v860
    %885 = vmatprep.subr.mxu0 0.0
    %886 = vmatpush1.msra.mxu0 %v861
    %887 = vmatprep.subr.mxu0 0.0
    %888 = vmatpush1.msra.mxu0 %v862
    %889 = vmatprep.subr.mxu0 0.0
    %890 = vmatpush1.msra.mxu0 %v863
    %891 = vmatprep.subr.mxu0 0.0
    %892 = vmatpush1.msra.mxu0 %v864
    %893 = vmatprep.subr.mxu0 0.0
    %894 = vmatpush1.msra.mxu0 %v865
    %895 = vmatprep.subr.mxu0 0.0
    %896 = vmatpush1.msra.mxu0 %v866
    %897 = vmatprep.subr.mxu0 0.0
    %898 = vmatpush1.msra.mxu0 %v867
    %899 = vmatprep.subr.mxu0 0.0
    %900 = vmatpush1.msra.mxu0 %v868
    %901 = vmatprep.subr.mxu0 0.0
    %902 = vmatpush1.msra.mxu0 %v869
    %903 = vmatprep.subr.mxu0 0.0
    %904 = vmatpush1.msra.mxu0 %v870
    %905 = vmatprep.subr.mxu0 0.0
    %906 = vmatpush1.msra.mxu0 %v871
    %907 = vmatprep.subr.mxu0 0.0
    %908 = vmatpush1.msra.mxu0 %v872
    %909 = vmatprep.subr.mxu0 0.0
    %910 = vmatpush1.msra.mxu0 %v873
    %911 = vmatprep.subr.mxu0 0.0
    %912 = vmatpush1.msra.mxu0 %v874
    %913 = vmatprep.subr.mxu0 0.0
    %914 = vmatpush1.msra.mxu0 %v875
    %915 = vmatprep.subr.mxu0 0.0
    %916 = vmatpush1.msra.mxu0 0.0
    %917 = vmatprep.subr.mxu0 0.0
    %918 = vmatpush1.msra.mxu0 0.0
    %919 = vmatprep.subr.mxu0 0.0
    %920 = vmatpush1.msra.mxu0 0.0
    %921 = vmatprep.subr.mxu0 0.0
    %922 = vmatpush1.msra.mxu0 0.0
    %923 = vmatprep.subr.mxu0 0.0
    %924 = vmatpush1.msra.mxu0 0.0
    %925 = vmatprep.subr.mxu0 0.0
    %926 = vmatpush1.msra.mxu0 0.0
    %927 = vmatprep.subr.mxu0 0.0
    %928 = vmatpush1.msra.mxu0 0.0
    %929 = vmatprep.subr.mxu0 0.0
    %930 = vmatpush1.msra.mxu0 0.0
    %931 = vmatprep.subr.mxu0 0.0
    %932 = vmatpush1.msra.mxu0 0.0
    %933 = vmatprep.subr.mxu0 0.0
    %934 = vmatpush1.msra.mxu0 0.0
    %935 = vmatprep.subr.mxu0 0.0
    %936 = vmatpush1.msra.mxu0 0.0
    %937 = vmatprep.subr.mxu0 0.0
    %938 = vmatpush1.msra.mxu0 0.0
    %939 = vmatprep.subr.mxu0 0.0
    %940 = vmatpush1.msra.mxu0 0.0
    %941 = vmatprep.subr.mxu0 0.0
    %942 = vmatpush1.msra.mxu0 0.0
    %943 = vmatprep.subr.mxu0 0.0
    %944 = vmatpush1.msra.mxu0 0.0
    %945 = vmatprep.subr.mxu0 0.0
    %946 = vmatpush1.msra.mxu0 0.0
    %947 = vmatprep.mubr.f32.mxu0 0.0
    %948 = vmatmul.mubr.f32.gmra.mrb[0].mxu0 %v844
    %v949 = vpop.f32.mrb[0].mxu0
    %v950 = vadd.f32 %v881, %v949
    %v951 = vpop.f32.mrb[0].mxu0
    %952 = vmatprep.mubr.f32.mxu0 0.0
    %953 = vmatmul.mubr.f32.gmra.mrb[0].mxu0 %v845
    %v954 = vpop.f32.mrb[0].mxu0
    %v955 = vadd.f32 %v881, %v954
    %v956 = vpop.f32.mrb[0].mxu0
    %957 = vmatprep.mubr.f32.mxu0 0.0
    %958 = vmatmul.mubr.f32.gmra.mrb[0].mxu0 %v846
    %v959 = vpop.f32.mrb[0].mxu0
    %v960 = vadd.f32 %v881, %v959
    %v961 = vpop.f32.mrb[0].mxu0
    %962 = vmatprep.mubr.f32.mxu0 0.0
    %963 = vmatmul.mubr.f32.gmra.mrb[0].mxu0 %v847
    %v964 = vpop.f32.mrb[0].mxu0
    %v965 = vadd.f32 %v881, %v964
    %v966 = vpop.f32.mrb[0].mxu0
    %967 = vmatprep.mubr.f32.mxu0 0.0
    %968 = vmatmul.mubr.f32.gmra.mrb[0].mxu0 %v848
    %v969 = vpop.f32.mrb[0].mxu0
    %v970 = vadd.f32 %v881, %v969
    %v971 = vpop.f32.mrb[0].mxu0
    %972 = vmatprep.mubr.f32.mxu0 0.0
    %973 = vmatmul.mubr.f32.gmra.mrb[0].mxu0 %v849
    %v974 = vpop.f32.mrb[0].mxu0
    %v975 = vadd.f32 %v881, %v974
    %v976 = vpop.f32.mrb[0].mxu0
    %977 = vmatprep.mubr.f32.mxu0 0.0
    %978 = vmatmul.mubr.f32.gmra.mrb[0].mxu0 %v850
    %v979 = vpop.f32.mrb[0].mxu0
    %v980 = vadd.f32 %v881, %v979
    %v981 = vpop.f32.mrb[0].mxu0
    %982 = vmatprep.mubr.f32.mxu0 0.0
    %983 = vmatmul.mubr.f32.gmra.mrb[0].mxu0 %v851
    %v984 = vpop.f32.mrb[0].mxu0
    %v985 = vadd.f32 %v881, %v984
    %v986 = vpop.f32.mrb[0].mxu0
    %987 = vmatprep.mubr.f32.mxu0 0.0
    %988 = vmatmul.mubr.f32.gmra.mrb[0].mxu0 %v852
    %v989 = vpop.f32.mrb[0].mxu0
    %v990 = vadd.f32 %v881, %v989
    %v991 = vpop.f32.mrb[0].mxu0
    %992 = vmatprep.mubr.f32.mxu0 0.0
    %993 = vmatmul.mubr.f32.gmra.mrb[0].mxu0 %v853
    %v994 = vpop.f32.mrb[0].mxu0
    %v995 = vadd.f32 %v881, %v994
    %v996 = vpop.f32.mrb[0].mxu0
    %997 = vmatprep.mubr.f32.mxu0 0.0
    %998 = vmatmul.mubr.f32.gmra.mrb[0].mxu0 %v854
    %v999 = vpop.f32.mrb[0].mxu0
    %v1000 = vadd.f32 %v881, %v999
    %v1001 = vpop.f32.mrb[0].mxu0
    %1002 = vmatprep.mubr.f32.mxu0 0.0
    %1003 = vmatmul.mubr.f32.gmra.mrb[0].mxu0 %v855
    %v1004 = vpop.f32.mrb[0].mxu0
    %v1005 = vadd.f32 %v881, %v1004
    %v1006 = vpop.f32.mrb[0].mxu0
    %1007 = vmatprep.mubr.f32.mxu0 0.0
    %1008 = vmatmul.mubr.f32.gmra.mrb[0].mxu0 %v856
    %v1009 = vpop.f32.mrb[0].mxu0
    %v1010 = vadd.f32 %v881, %v1009
    %v1011 = vpop.f32.mrb[0].mxu0
    %1012 = vmatprep.mubr.f32.mxu0 0.0
    %1013 = vmatmul.mubr.f32.gmra.mrb[0].mxu0 %v857
    %v1014 = vpop.f32.mrb[0].mxu0
    %v1015 = vadd.f32 %v881, %v1014
    %v1016 = vpop.f32.mrb[0].mxu0
    %1017 = vmatprep.mubr.f32.mxu0 0.0
    %1018 = vmatmul.mubr.f32.gmra.mrb[0].mxu0 %v858
    %v1019 = vpop.f32.mrb[0].mxu0
    %v1020 = vadd.f32 %v881, %v1019
    %v1021 = vpop.f32.mrb[0].mxu0
    %1022 = vmatprep.mubr.f32.mxu0 0.0
    %1023 = vmatmul.mubr.f32.gmra.mrb[0].mxu0 %v859
    %v1024 = vpop.f32.mrb[0].mxu0
    %v1025 = vadd.f32 %v881, %v1024
    %v1026 = vpop.f32.mrb[0].mxu0
    %1027 = vdwg.mxu0
    %1028 = vst [vmem:[%s8] sm:$0xff] %v950
    %1029 = vst [vmem:[%s8 + $0x8] sm:$0xff] %v955
    %1030 = vst [vmem:[%s8 + $0x10] sm:$0xff] %v960
    %1031 = vst [vmem:[%s8 + $0x18] sm:$0xff] %v965
    %1032 = vst [vmem:[%s8 + $0x20] sm:$0xff] %v970
    %1033 = vst [vmem:[%s8 + $0x28] sm:$0xff] %v975
    %1034 = vst [vmem:[%s8 + $0x30] sm:$0xff] %v980
    %1035 = vst [vmem:[%s8 + $0x38] sm:$0xff] %v985
    %1036 = vst [vmem:[%s8 + $0x40] sm:$0xff] %v990
    %1037 = vst [vmem:[%s8 + $0x48] sm:$0xff] %v995
    %1038 = vst [vmem:[%s8 + $0x50] sm:$0xff] %v1000
    %1039 = vst [vmem:[%s8 + $0x58] sm:$0xff] %v1005
    %1040 = vst [vmem:[%s8 + $0x60] sm:$0xff] %v1010
    %1041 = vst [vmem:[%s8 + $0x68] sm:$0xff] %v1015
    %1042 = vst [vmem:[%s8 + $0x70] sm:$0xff] %v1020
    %1043 = vst [vmem:[%s8 + $0x78] sm:$0xff] %v1025
  $region41: #{fairgnn_forward.3} parent=0 // pred_fallthru
    _
  // Predicated region
  $region42: #{fairgnn_forward.3} parent=0 // pred_check
    _
  $region43: #{fairgnn_forward.3} parent=0 // pred_check_branch
    %1045 = sbr.rel (0) target = $region45
  $region44: #{fairgnn_forward.3} parent=0 // pred_region
    _
  $region45: #{fairgnn_forward.3} parent=0 // pred_fallthru
    _
  // Predicated region
  $region46: #{fairgnn_forward.3} parent=0 // pred_check
    _
  $region47: #{fairgnn_forward.3} parent=0 // pred_check_branch
    %1047 = sbr.rel (0) target = $region49
  $region48: #{fairgnn_forward.3} parent=0 // pred_region
    _
  $region49: #{fairgnn_forward.3} parent=0 // pred_fallthru
    _

</llo_original>
